<compile_context>
chip_gen: v5e
topology: v5e:2x2
jax: 0.10.0
libtpu: 0.0.40
codegen_flags: <defaults>
</compile_context>

<pallas_src>
import math

import jax
import jax.numpy as jnp
from jax import lax
from jax.experimental import pallas as pl
from jax.experimental.pallas import tpu as pltpu

# ----- small synthetic BERT config -----
VOCAB = 128
MAX_POS = 128
TYPE_VOCAB = 2
HIDDEN = 32
LAYERS = 2
HEADS = 4
HEAD_DIM = HIDDEN // HEADS
FFN = 64
SEQ = 8
BATCH = 2
LN_EPS = 1e-12


# ----------------------------- kernel helpers ------------------------------
def _layernorm(x, gamma, beta):
    mu = jnp.mean(x, axis=-1, keepdims=True)
    var = jnp.mean((x - mu) ** 2, axis=-1, keepdims=True)
    return (x - mu) * lax.rsqrt(var + LN_EPS) * gamma + beta


# ----------------------------- fused Pallas kernel --------------------------
def fused_bert_kernel(ids_ref, bias_ref, addemb_ref, wemb_ref, embln_ref,
                      attnw_ref, ffnw_ref, vec_ref, poolw_ref, poolb_ref,
                      out_ref):
    f32 = jnp.float32
    N = BATCH * SEQ
    H = HIDDEN

    # ---- embeddings: one-hot matmul gather on the MXU (no dynamic indexing);
    #      positional + token-type embeddings pre-added on the host ----
    ids = ids_ref[...]                                            # (N, 1) int32
    word_oh = (lax.broadcasted_iota(jnp.int32, (N, VOCAB), 1) == ids).astype(f32)
    emb = jnp.dot(word_oh, wemb_ref[...], preferred_element_type=f32)
    emb = emb + addemb_ref[...]                                   # (N, H)
    x = _layernorm(emb, embln_ref[0:1, :], embln_ref[1:2, :])     # (N, H)

    bias = bias_ref[...]                                          # (N, N) additive bias
    scale = 1.0 / math.sqrt(HEAD_DIM)

    # ---- encoder layers: everything stays VMEM-resident, static unroll ----
    for l in range(LAYERS):
        aw = attnw_ref[l]                                         # (H, 4H) = [Wq|Wk|Wv|Wo]
        fw = ffnw_ref[l]                                          # (H+FFN, FFN) = [Wi ; Wo2(pad)]
        vs = vec_ref[l]                                           # (4, 3H)  packed biases / LN

        # fused QKV projection: one (N,H)@(H,3H) dot, lane-slice q/k/v
        qkv = jnp.dot(x, aw[:, :3 * H], preferred_element_type=f32) + vs[0:1, :]
        q = qkv[:, 0:H]
        k = qkv[:, H:2 * H]
        v = qkv[:, 2 * H:3 * H]

        ctx_parts = []
        for h in range(HEADS):                                    # static head loop
            sl = slice(h * HEAD_DIM, (h + 1) * HEAD_DIM)
            # q @ k^T over the flattened tokens; block-diagonal bias keeps
            # attention within each batch element and masks padding keys.
            s = lax.dot_general(q[:, sl], k[:, sl], (((1,), (1,)), ((), ())),
                                preferred_element_type=f32) * scale + bias
            # scores are bounded and masked entries (-1e9) underflow to exp=0,
            # so the usual max-subtraction is skipped (perf: shorter XLU chain).
            p = jnp.exp(s)
            p = p * pl.reciprocal(jnp.sum(p, axis=-1, keepdims=True), approx=True)
            ctx_parts.append(jnp.dot(p, v[:, sl], preferred_element_type=f32))
        ctx = jnp.concatenate(ctx_parts, axis=-1)                 # (N, H)

        # single output projection per layer
        attn = jnp.dot(ctx, aw[:, 3 * H:], preferred_element_type=f32) + vs[1:2, :H]
        x1 = _layernorm(x + attn, vs[1:2, H:2 * H], vs[1:2, 2 * H:])

        hmid = jnp.dot(x1, fw[:H, :], preferred_element_type=f32) + vs[2:3, :FFN]
        # TODO(synk): HF BERT uses exact erf GeLU; tanh approximation used here.
        hmid = jax.nn.gelu(hmid, approximate=True)
        ffn = jnp.dot(hmid, fw[H:, :H], preferred_element_type=f32) + vs[3:4, :H]
        x = _layernorm(x1 + ffn, vs[3:4, H:2 * H], vs[3:4, 2 * H:])

    # ---- pooler + fused valence/arousal head on all N rows; CLS rows are
    #      selected in the wrapper (no in-kernel row gather) ----
    pooled = jnp.tanh(jnp.dot(x, poolw_ref[:, :H], preferred_element_type=f32)
                      + poolb_ref[:, :H])
    out = jnp.dot(pooled, poolw_ref[:, H:], preferred_element_type=f32) + poolb_ref[:, H:]
    out_ref[...] = out.astype(out_ref.dtype)                      # (N, 2)


# ----------------------------- parameters & forward -------------------------
def init_params(seed=0):
    key = jax.random.PRNGKey(seed)
    keys = iter(jax.random.split(key, 16))

    def nrm(shape):
        return jax.random.normal(next(keys), shape, jnp.float32) * 0.02

    def zeros(shape):
        return jnp.zeros(shape, jnp.float32)

    def ones(shape):
        return jnp.ones(shape, jnp.float32)

    return {
        "word_emb": nrm((VOCAB, HIDDEN)),
        "pos_emb": nrm((MAX_POS, HIDDEN)),
        "type_emb": nrm((TYPE_VOCAB, HIDDEN)),
        "emb_ln_g": ones((1, HIDDEN)), "emb_ln_b": zeros((1, HIDDEN)),
        # per-layer weights stacked along a leading LAYERS axis
        "wq": nrm((LAYERS, HIDDEN, HIDDEN)), "bq": zeros((LAYERS, 1, HIDDEN)),
        "wk": nrm((LAYERS, HIDDEN, HIDDEN)), "bk": zeros((LAYERS, 1, HIDDEN)),
        "wv": nrm((LAYERS, HIDDEN, HIDDEN)), "bv": zeros((LAYERS, 1, HIDDEN)),
        "wo": nrm((LAYERS, HIDDEN, HIDDEN)), "bo": zeros((LAYERS, 1, HIDDEN)),
        "ln1_g": ones((LAYERS, 1, HIDDEN)), "ln1_b": zeros((LAYERS, 1, HIDDEN)),
        "wi": nrm((LAYERS, HIDDEN, FFN)), "bi": zeros((LAYERS, 1, FFN)),
        "wo2": nrm((LAYERS, FFN, HIDDEN)), "bo2": zeros((LAYERS, 1, HIDDEN)),
        "ln2_g": ones((LAYERS, 1, HIDDEN)), "ln2_b": zeros((LAYERS, 1, HIDDEN)),
        "pooler_w": nrm((HIDDEN, HIDDEN)), "pooler_b": zeros((1, HIDDEN)),
        "valence_w": nrm((HIDDEN, 1)), "valence_b": zeros((1, 1)),
        "arousal_w": nrm((HIDDEN, 1)), "arousal_b": zeros((1, 1)),
    }


def bert_absa_forward(params, input_ids, token_type_ids, attention_mask):
    B, S = input_ids.shape
    N = B * S
    H = HIDDEN

    # token ids as a lane-1 column for the in-kernel one-hot gather
    ids_col = input_ids.reshape(N, 1).astype(jnp.int32)

    # Block-diagonal additive attention bias over the flattened (B*S) tokens:
    # 0 for same-batch valid keys, -1e9 for padding keys / cross-batch pairs.
    mask_flat = attention_mask.reshape(N).astype(jnp.float32)
    batch_idx = jnp.repeat(jnp.arange(B, dtype=jnp.int32), S)
    same_batch = batch_idx[:, None] == batch_idx[None, :]
    attn_bias = jnp.where(same_batch & (mask_flat[None, :] > 0.5),
                          0.0, -1e9).astype(jnp.float32)          # (N, N), ~1 KB

    # positional rows tiled + token-type embedding gathered on the host and
    # pre-added -> single (N, H) additive-embedding input
    add_emb = (jnp.tile(params["pos_emb"][:S], (B, 1))
               + params["type_emb"][token_type_ids.reshape(N)]).astype(jnp.float32)

    # --- pack parameters into a few slabs (cuts DMA descriptor count ~3x) ---
    emb_ln = jnp.concatenate([params["emb_ln_g"], params["emb_ln_b"]], axis=0)  # (2, H)

    attn_w = jnp.concatenate([params["wq"], params["wk"],
                              params["wv"], params["wo"]], axis=2)              # (L, H, 4H)

    ffn_w = jnp.zeros((LAYERS, H + FFN, FFN), jnp.float32)                      # (L, H+FFN, FFN)
    ffn_w = ffn_w.at[:, :H, :].set(params["wi"])
    ffn_w = ffn_w.at[:, H:, :H].set(params["wo2"])

    vec0 = jnp.concatenate([params["bq"], params["bk"], params["bv"]], axis=2)      # (L,1,3H)
    vec1 = jnp.concatenate([params["bo"], params["ln1_g"], params["ln1_b"]], axis=2)
    vec2 = jnp.concatenate([params["bi"],
                            jnp.zeros((LAYERS, 1, 3 * H - FFN), jnp.float32)], axis=2)
    vec3 = jnp.concatenate([params["bo2"], params["ln2_g"], params["ln2_b"]], axis=2)
    vec_slab = jnp.concatenate([vec0, vec1, vec2, vec3], axis=1)                # (L, 4, 3H)

    # fuse pooler + valence/arousal heads into one (H, H+2) weight slab
    pool_head_w = jnp.concatenate([params["pooler_w"],
                                   params["valence_w"], params["arousal_w"]], axis=1)
    pool_head_b = jnp.concatenate([params["pooler_b"],
                                   params["valence_b"], params["arousal_b"]], axis=1)

    args = (ids_col, attn_bias, add_emb, params["word_emb"], emb_ln,
            attn_w, ffn_w, vec_slab, pool_head_w, pool_head_b)

    vmem_spec = pl.BlockSpec(memory_space=pltpu.MemorySpace.VMEM)
    out_full = pl.pallas_call(
        fused_bert_kernel,
        out_shape=jax.ShapeDtypeStruct((N, 2), jnp.float32),
        in_specs=[vmem_spec] * len(args),
        out_specs=vmem_spec,
    )(*args)

    # select the [CLS] row of each batch element (trivial XLA slice)
    cls_out = out_full.reshape(B, S, 2)[:, 0, :]                  # (B, 2)
    valence = cls_out[:, 0:1]
    arousal = cls_out[:, 1:2]
    return valence, arousal


# ----------------------------------- main -----------------------------------
if __name__ == "__main__":
    params = init_params(seed=0)

    key = jax.random.PRNGKey(0)
    input_ids = jax.random.randint(key, (BATCH, SEQ), 0, VOCAB, dtype=jnp.int32)
    token_type_ids = jnp.zeros((BATCH, SEQ), jnp.int32)
    attention_mask = jnp.ones((BATCH, SEQ), jnp.int32).at[1, SEQ - 2:].set(0)

    fwd = jax.jit(bert_absa_forward)
    valence, arousal = fwd(params, input_ids, token_type_ids, attention_mask)
    jax.block_until_ready((valence, arousal))

    assert valence.shape == (BATCH, 1) and arousal.shape == (BATCH, 1)
    assert bool(jnp.all(jnp.isfinite(valence))) and bool(jnp.all(jnp.isfinite(arousal)))
    print("KERNEL_OK")
</pallas_src>

<mosaic_0001>
module attributes {stable_mosaic.version = 11 : i64} {
  func.func @fused_bert_kernel(%arg0: memref<16x1xi32, #tpu.memory_space<vmem>>, %arg1: memref<16x16xf32, #tpu.memory_space<vmem>>, %arg2: memref<16x32xf32, #tpu.memory_space<vmem>>, %arg3: memref<128x32xf32, #tpu.memory_space<vmem>>, %arg4: memref<2x32xf32, #tpu.memory_space<vmem>>, %arg5: memref<2x32x128xf32, #tpu.memory_space<vmem>>, %arg6: memref<2x96x64xf32, #tpu.memory_space<vmem>>, %arg7: memref<2x4x96xf32, #tpu.memory_space<vmem>>, %arg8: memref<32x34xf32, #tpu.memory_space<vmem>>, %arg9: memref<1x34xf32, #tpu.memory_space<vmem>>, %arg10: memref<16x2xf32, #tpu.memory_space<vmem>>) attributes {dimension_semantics = [], scalar_prefetch = 0 : i64, scratch_operands = 0 : i64, tpu.core_type = #tpu.core_type<tc>} {
    %c0 = arith.constant 0 : index
    %c0_0 = arith.constant 0 : index
    %0 = vector.load %arg0[%c0, %c0_0] : memref<16x1xi32, #tpu.memory_space<vmem>>, vector<16x1xi32>
    %1 = tpu.iota {dimensions = array<i32: 1>} : vector<16x128xi32>
    %2 = vector.broadcast %0 : vector<16x1xi32> to vector<16x128xi32>
    %3 = arith.cmpi eq, %1, %2 : vector<16x128xi32>
    %4 = arith.extui %3 : vector<16x128xi1> to vector<16x128xi32>
    %5 = arith.sitofp %4 : vector<16x128xi32> to vector<16x128xf32>
    %c0_1 = arith.constant 0 : index
    %c0_2 = arith.constant 0 : index
    %6 = vector.load %arg3[%c0_1, %c0_2] : memref<128x32xf32, #tpu.memory_space<vmem>>, vector<128x32xf32>
    %cst = arith.constant dense<0.000000e+00> : vector<16x32xf32>
    %7 = tpu.matmul %5, %6, %cst {dimension_numbers = #tpu.dot_dimension_numbers<[1], [0], [0], [1], [0, 0, 1, 1], [], []>} : vector<16x128xf32>, vector<128x32xf32>, vector<16x32xf32> -> vector<16x32xf32>
    %c0_3 = arith.constant 0 : index
    %c0_4 = arith.constant 0 : index
    %8 = vector.load %arg2[%c0_3, %c0_4] : memref<16x32xf32, #tpu.memory_space<vmem>>, vector<16x32xf32>
    %9 = arith.addf %7, %8 : vector<16x32xf32>
    %c0_5 = arith.constant 0 : index
    %c0_6 = arith.constant 0 : index
    %10 = vector.load %arg4[%c0_5, %c0_6] : memref<2x32xf32, #tpu.memory_space<vmem>>, vector<1x32xf32>
    %c1 = arith.constant 1 : index
    %c0_7 = arith.constant 0 : index
    %11 = vector.load %arg4[%c1, %c0_7] : memref<2x32xf32, #tpu.memory_space<vmem>>, vector<1x32xf32>
    %cst_8 = arith.constant dense<0.000000e+00> : vector<16xf32>
    %12 = vector.multi_reduction <add>, %9, %cst_8 [1] : vector<16x32xf32> to vector<16xf32>
    %13 = vector.shape_cast %12 : vector<16xf32> to vector<16x1xf32>
    %cst_9 = arith.constant 3.200000e+01 : f32
    %14 = vector.broadcast %cst_9 : f32 to vector<16x1xf32>
    %15 = arith.divf %13, %14 : vector<16x1xf32>
    %16 = vector.broadcast %15 : vector<16x1xf32> to vector<16x32xf32>
    %17 = arith.subf %9, %16 : vector<16x32xf32>
    %18 = arith.mulf %17, %17 : vector<16x32xf32>
    %cst_10 = arith.constant dense<0.000000e+00> : vector<16xf32>
    %19 = vector.multi_reduction <add>, %18, %cst_10 [1] : vector<16x32xf32> to vector<16xf32>
    %20 = vector.shape_cast %19 : vector<16xf32> to vector<16x1xf32>
    %cst_11 = arith.constant 3.200000e+01 : f32
    %21 = vector.broadcast %cst_11 : f32 to vector<16x1xf32>
    %22 = arith.divf %20, %21 : vector<16x1xf32>
    %23 = vector.broadcast %15 : vector<16x1xf32> to vector<16x32xf32>
    %24 = arith.subf %9, %23 : vector<16x32xf32>
    %cst_12 = arith.constant 9.99999996E-13 : f32
    %25 = vector.broadcast %cst_12 : f32 to vector<16x1xf32>
    %26 = arith.addf %22, %25 : vector<16x1xf32>
    %27 = math.rsqrt %26 : vector<16x1xf32>
    %28 = vector.broadcast %27 : vector<16x1xf32> to vector<16x32xf32>
    %29 = arith.mulf %24, %28 : vector<16x32xf32>
    %30 = vector.broadcast %10 : vector<1x32xf32> to vector<16x32xf32>
    %31 = arith.mulf %29, %30 : vector<16x32xf32>
    %32 = vector.broadcast %11 : vector<1x32xf32> to vector<16x32xf32>
    %33 = arith.addf %31, %32 : vector<16x32xf32>
    %c0_13 = arith.constant 0 : index
    %c0_14 = arith.constant 0 : index
    %34 = vector.load %arg1[%c0_13, %c0_14] : memref<16x16xf32, #tpu.memory_space<vmem>>, vector<16x16xf32>
    %c0_15 = arith.constant 0 : index
    %c0_16 = arith.constant 0 : index
    %c0_17 = arith.constant 0 : index
    %35 = vector.load %arg5[%c0_15, %c0_16, %c0_17] : memref<2x32x128xf32, #tpu.memory_space<vmem>>, vector<1x32x128xf32>
    %36 = vector.shape_cast %35 : vector<1x32x128xf32> to vector<32x128xf32>
    %c0_18 = arith.constant 0 : index
    %c0_19 = arith.constant 0 : index
    %c0_20 = arith.constant 0 : index
    %37 = vector.load %arg6[%c0_18, %c0_19, %c0_20] : memref<2x96x64xf32, #tpu.memory_space<vmem>>, vector<1x96x64xf32>
    %38 = vector.shape_cast %37 : vector<1x96x64xf32> to vector<96x64xf32>
    %c0_21 = arith.constant 0 : index
    %c0_22 = arith.constant 0 : index
    %c0_23 = arith.constant 0 : index
    %39 = vector.load %arg7[%c0_21, %c0_22, %c0_23] : memref<2x4x96xf32, #tpu.memory_space<vmem>>, vector<1x4x96xf32>
    %40 = vector.shape_cast %39 : vector<1x4x96xf32> to vector<4x96xf32>
    %41 = vector.extract_strided_slice %36 {offsets = [0, 0], sizes = [32, 96], strides = [1, 1]} : vector<32x128xf32> to vector<32x96xf32>
    %cst_24 = arith.constant dense<0.000000e+00> : vector<16x96xf32>
    %42 = tpu.matmul %33, %41, %cst_24 {dimension_numbers = #tpu.dot_dimension_numbers<[1], [0], [0], [1], [0, 0, 1, 1], [], []>} : vector<16x32xf32>, vector<32x96xf32>, vector<16x96xf32> -> vector<16x96xf32>
    %43 = vector.extract_strided_slice %40 {offsets = [0, 0], sizes = [1, 96], strides = [1, 1]} : vector<4x96xf32> to vector<1x96xf32>
    %44 = vector.broadcast %43 : vector<1x96xf32> to vector<16x96xf32>
    %45 = arith.addf %42, %44 : vector<16x96xf32>
    %46 = vector.extract_strided_slice %45 {offsets = [0, 0], sizes = [16, 32], strides = [1, 1]} : vector<16x96xf32> to vector<16x32xf32>
    %47 = vector.extract_strided_slice %45 {offsets = [0, 32], sizes = [16, 32], strides = [1, 1]} : vector<16x96xf32> to vector<16x32xf32>
    %48 = vector.extract_strided_slice %45 {offsets = [0, 64], sizes = [16, 32], strides = [1, 1]} : vector<16x96xf32> to vector<16x32xf32>
    %49 = vector.extract_strided_slice %46 {offsets = [0, 0], sizes = [16, 8], strides = [1, 1]} : vector<16x32xf32> to vector<16x8xf32>
    %50 = vector.extract_strided_slice %47 {offsets = [0, 0], sizes = [16, 8], strides = [1, 1]} : vector<16x32xf32> to vector<16x8xf32>
    %cst_25 = arith.constant dense<0.000000e+00> : vector<16x16xf32>
    %51 = tpu.matmul %49, %50, %cst_25 {dimension_numbers = #tpu.dot_dimension_numbers<[1], [1], [0], [0], [0, 0, 1, 0], [], []>} : vector<16x8xf32>, vector<16x8xf32>, vector<16x16xf32> -> vector<16x16xf32>
    %cst_26 = arith.constant 0.353553385 : f32
    %52 = vector.broadcast %cst_26 : f32 to vector<16x16xf32>
    %53 = arith.mulf %51, %52 : vector<16x16xf32>
    %54 = arith.addf %53, %34 : vector<16x16xf32>
    %55 = math.exp %54 : vector<16x16xf32>
    %cst_27 = arith.constant dense<0.000000e+00> : vector<16xf32>
    %56 = vector.multi_reduction <add>, %55, %cst_27 [1] : vector<16x16xf32> to vector<16xf32>
    %57 = vector.shape_cast %56 : vector<16xf32> to vector<16x1xf32>
    %58 = tpu.reciprocal %57 {approx = true} : vector<16x1xf32> -> vector<16x1xf32>
    %59 = vector.broadcast %58 : vector<16x1xf32> to vector<16x16xf32>
    %60 = arith.mulf %55, %59 : vector<16x16xf32>
    %61 = vector.extract_strided_slice %48 {offsets = [0, 0], sizes = [16, 8], strides = [1, 1]} : vector<16x32xf32> to vector<16x8xf32>
    %cst_28 = arith.constant dense<0.000000e+00> : vector<16x8xf32>
    %62 = tpu.matmul %60, %61, %cst_28 {dimension_numbers = #tpu.dot_dimension_numbers<[1], [0], [0], [1], [0, 0, 1, 1], [], []>} : vector<16x16xf32>, vector<16x8xf32>, vector<16x8xf32> -> vector<16x8xf32>
    %63 = vector.extract_strided_slice %46 {offsets = [0, 8], sizes = [16, 8], strides = [1, 1]} : vector<16x32xf32> to vector<16x8xf32>
    %64 = vector.extract_strided_slice %47 {offsets = [0, 8], sizes = [16, 8], strides = [1, 1]} : vector<16x32xf32> to vector<16x8xf32>
    %cst_29 = arith.constant dense<0.000000e+00> : vector<16x16xf32>
    %65 = tpu.matmul %63, %64, %cst_29 {dimension_numbers = #tpu.dot_dimension_numbers<[1], [1], [0], [0], [0, 0, 1, 0], [], []>} : vector<16x8xf32>, vector<16x8xf32>, vector<16x16xf32> -> vector<16x16xf32>
    %cst_30 = arith.constant 0.353553385 : f32
    %66 = vector.broadcast %cst_30 : f32 to vector<16x16xf32>
    %67 = arith.mulf %65, %66 : vector<16x16xf32>
    %68 = arith.addf %67, %34 : vector<16x16xf32>
    %69 = math.exp %68 : vector<16x16xf32>
    %cst_31 = arith.constant dense<0.000000e+00> : vector<16xf32>
    %70 = vector.multi_reduction <add>, %69, %cst_31 [1] : vector<16x16xf32> to vector<16xf32>
    %71 = vector.shape_cast %70 : vector<16xf32> to vector<16x1xf32>
    %72 = tpu.reciprocal %71 {approx = true} : vector<16x1xf32> -> vector<16x1xf32>
    %73 = vector.broadcast %72 : vector<16x1xf32> to vector<16x16xf32>
    %74 = arith.mulf %69, %73 : vector<16x16xf32>
    %75 = vector.extract_strided_slice %48 {offsets = [0, 8], sizes = [16, 8], strides = [1, 1]} : vector<16x32xf32> to vector<16x8xf32>
    %cst_32 = arith.constant dense<0.000000e+00> : vector<16x8xf32>
    %76 = tpu.matmul %74, %75, %cst_32 {dimension_numbers = #tpu.dot_dimension_numbers<[1], [0], [0], [1], [0, 0, 1, 1], [], []>} : vector<16x16xf32>, vector<16x8xf32>, vector<16x8xf32> -> vector<16x8xf32>
    %77 = vector.extract_strided_slice %46 {offsets = [0, 16], sizes = [16, 8], strides = [1, 1]} : vector<16x32xf32> to vector<16x8xf32>
    %78 = vector.extract_strided_slice %47 {offsets = [0, 16], sizes = [16, 8], strides = [1, 1]} : vector<16x32xf32> to vector<16x8xf32>
    %cst_33 = arith.constant dense<0.000000e+00> : vector<16x16xf32>
    %79 = tpu.matmul %77, %78, %cst_33 {dimension_numbers = #tpu.dot_dimension_numbers<[1], [1], [0], [0], [0, 0, 1, 0], [], []>} : vector<16x8xf32>, vector<16x8xf32>, vector<16x16xf32> -> vector<16x16xf32>
    %cst_34 = arith.constant 0.353553385 : f32
    %80 = vector.broadcast %cst_34 : f32 to vector<16x16xf32>
    %81 = arith.mulf %79, %80 : vector<16x16xf32>
    %82 = arith.addf %81, %34 : vector<16x16xf32>
    %83 = math.exp %82 : vector<16x16xf32>
    %cst_35 = arith.constant dense<0.000000e+00> : vector<16xf32>
    %84 = vector.multi_reduction <add>, %83, %cst_35 [1] : vector<16x16xf32> to vector<16xf32>
    %85 = vector.shape_cast %84 : vector<16xf32> to vector<16x1xf32>
    %86 = tpu.reciprocal %85 {approx = true} : vector<16x1xf32> -> vector<16x1xf32>
    %87 = vector.broadcast %86 : vector<16x1xf32> to vector<16x16xf32>
    %88 = arith.mulf %83, %87 : vector<16x16xf32>
    %89 = vector.extract_strided_slice %48 {offsets = [0, 16], sizes = [16, 8], strides = [1, 1]} : vector<16x32xf32> to vector<16x8xf32>
    %cst_36 = arith.constant dense<0.000000e+00> : vector<16x8xf32>
    %90 = tpu.matmul %88, %89, %cst_36 {dimension_numbers = #tpu.dot_dimension_numbers<[1], [0], [0], [1], [0, 0, 1, 1], [], []>} : vector<16x16xf32>, vector<16x8xf32>, vector<16x8xf32> -> vector<16x8xf32>
    %91 = vector.extract_strided_slice %46 {offsets = [0, 24], sizes = [16, 8], strides = [1, 1]} : vector<16x32xf32> to vector<16x8xf32>
    %92 = vector.extract_strided_slice %47 {offsets = [0, 24], sizes = [16, 8], strides = [1, 1]} : vector<16x32xf32> to vector<16x8xf32>
    %cst_37 = arith.constant dense<0.000000e+00> : vector<16x16xf32>
    %93 = tpu.matmul %91, %92, %cst_37 {dimension_numbers = #tpu.dot_dimension_numbers<[1], [1], [0], [0], [0, 0, 1, 0], [], []>} : vector<16x8xf32>, vector<16x8xf32>, vector<16x16xf32> -> vector<16x16xf32>
    %cst_38 = arith.constant 0.353553385 : f32
    %94 = vector.broadcast %cst_38 : f32 to vector<16x16xf32>
    %95 = arith.mulf %93, %94 : vector<16x16xf32>
    %96 = arith.addf %95, %34 : vector<16x16xf32>
    %97 = math.exp %96 : vector<16x16xf32>
    %cst_39 = arith.constant dense<0.000000e+00> : vector<16xf32>
    %98 = vector.multi_reduction <add>, %97, %cst_39 [1] : vector<16x16xf32> to vector<16xf32>
    %99 = vector.shape_cast %98 : vector<16xf32> to vector<16x1xf32>
    %100 = tpu.reciprocal %99 {approx = true} : vector<16x1xf32> -> vector<16x1xf32>
    %101 = vector.broadcast %100 : vector<16x1xf32> to vector<16x16xf32>
    %102 = arith.mulf %97, %101 : vector<16x16xf32>
    %103 = vector.extract_strided_slice %48 {offsets = [0, 24], sizes = [16, 8], strides = [1, 1]} : vector<16x32xf32> to vector<16x8xf32>
    %cst_40 = arith.constant dense<0.000000e+00> : vector<16x8xf32>
    %104 = tpu.matmul %102, %103, %cst_40 {dimension_numbers = #tpu.dot_dimension_numbers<[1], [0], [0], [1], [0, 0, 1, 1], [], []>} : vector<16x16xf32>, vector<16x8xf32>, vector<16x8xf32> -> vector<16x8xf32>
    %105 = tpu.concatenate %62, %76, %90, %104 in 1 : vector<16x8xf32>, vector<16x8xf32>, vector<16x8xf32>, vector<16x8xf32> -> vector<16x32xf32>
    %106 = vector.extract_strided_slice %36 {offsets = [0, 96], sizes = [32, 32], strides = [1, 1]} : vector<32x128xf32> to vector<32x32xf32>
    %cst_41 = arith.constant dense<0.000000e+00> : vector<16x32xf32>
    %107 = tpu.matmul %105, %106, %cst_41 {dimension_numbers = #tpu.dot_dimension_numbers<[1], [0], [0], [1], [0, 0, 1, 1], [], []>} : vector<16x32xf32>, vector<32x32xf32>, vector<16x32xf32> -> vector<16x32xf32>
    %108 = vector.extract_strided_slice %40 {offsets = [1, 0], sizes = [1, 32], strides = [1, 1]} : vector<4x96xf32> to vector<1x32xf32>
    %109 = vector.broadcast %108 : vector<1x32xf32> to vector<16x32xf32>
    %110 = arith.addf %107, %109 : vector<16x32xf32>
    %111 = arith.addf %33, %110 : vector<16x32xf32>
    %112 = vector.extract_strided_slice %40 {offsets = [1, 32], sizes = [1, 32], strides = [1, 1]} : vector<4x96xf32> to vector<1x32xf32>
    %113 = vector.extract_strided_slice %40 {offsets = [1, 64], sizes = [1, 32], strides = [1, 1]} : vector<4x96xf32> to vector<1x32xf32>
    %cst_42 = arith.constant dense<0.000000e+00> : vector<16xf32>
    %114 = vector.multi_reduction <add>, %111, %cst_42 [1] : vector<16x32xf32> to vector<16xf32>
    %115 = vector.shape_cast %114 : vector<16xf32> to vector<16x1xf32>
    %cst_43 = arith.constant 3.200000e+01 : f32
    %116 = vector.broadcast %cst_43 : f32 to vector<16x1xf32>
    %117 = arith.divf %115, %116 : vector<16x1xf32>
    %118 = vector.broadcast %117 : vector<16x1xf32> to vector<16x32xf32>
    %119 = arith.subf %111, %118 : vector<16x32xf32>
    %120 = arith.mulf %119, %119 : vector<16x32xf32>
    %cst_44 = arith.constant dense<0.000000e+00> : vector<16xf32>
    %121 = vector.multi_reduction <add>, %120, %cst_44 [1] : vector<16x32xf32> to vector<16xf32>
    %122 = vector.shape_cast %121 : vector<16xf32> to vector<16x1xf32>
    %cst_45 = arith.constant 3.200000e+01 : f32
    %123 = vector.broadcast %cst_45 : f32 to vector<16x1xf32>
    %124 = arith.divf %122, %123 : vector<16x1xf32>
    %125 = vector.broadcast %117 : vector<16x1xf32> to vector<16x32xf32>
    %126 = arith.subf %111, %125 : vector<16x32xf32>
    %cst_46 = arith.constant 9.99999996E-13 : f32
    %127 = vector.broadcast %cst_46 : f32 to vector<16x1xf32>
    %128 = arith.addf %124, %127 : vector<16x1xf32>
    %129 = math.rsqrt %128 : vector<16x1xf32>
    %130 = vector.broadcast %129 : vector<16x1xf32> to vector<16x32xf32>
    %131 = arith.mulf %126, %130 : vector<16x32xf32>
    %132 = vector.broadcast %112 : vector<1x32xf32> to vector<16x32xf32>
    %133 = arith.mulf %131, %132 : vector<16x32xf32>
    %134 = vector.broadcast %113 : vector<1x32xf32> to vector<16x32xf32>
    %135 = arith.addf %133, %134 : vector<16x32xf32>
    %136 = vector.extract_strided_slice %38 {offsets = [0, 0], sizes = [32, 64], strides = [1, 1]} : vector<96x64xf32> to vector<32x64xf32>
    %cst_47 = arith.constant dense<0.000000e+00> : vector<16x64xf32>
    %137 = tpu.matmul %135, %136, %cst_47 {dimension_numbers = #tpu.dot_dimension_numbers<[1], [0], [0], [1], [0, 0, 1, 1], [], []>} : vector<16x32xf32>, vector<32x64xf32>, vector<16x64xf32> -> vector<16x64xf32>
    %138 = vector.extract_strided_slice %40 {offsets = [2, 0], sizes = [1, 64], strides = [1, 1]} : vector<4x96xf32> to vector<1x64xf32>
    %139 = vector.broadcast %138 : vector<1x64xf32> to vector<16x64xf32>
    %140 = arith.addf %137, %139 : vector<16x64xf32>
    %141 = arith.mulf %140, %140 : vector<16x64xf32>
    %142 = arith.mulf %140, %141 : vector<16x64xf32>
    %cst_48 = arith.constant 4.471500e-02 : f32
    %143 = vector.broadcast %cst_48 : f32 to vector<16x64xf32>
    %144 = arith.mulf %143, %142 : vector<16x64xf32>
    %145 = arith.addf %140, %144 : vector<16x64xf32>
    %cst_49 = arith.constant 0.797884583 : f32
    %146 = vector.broadcast %cst_49 : f32 to vector<16x64xf32>
    %147 = arith.mulf %146, %145 : vector<16x64xf32>
    %148 = math.tanh %147 : vector<16x64xf32>
    %cst_50 = arith.constant 1.000000e+00 : f32
    %149 = vector.broadcast %cst_50 : f32 to vector<16x64xf32>
    %150 = arith.addf %149, %148 : vector<16x64xf32>
    %cst_51 = arith.constant 5.000000e-01 : f32
    %151 = vector.broadcast %cst_51 : f32 to vector<16x64xf32>
    %152 = arith.mulf %151, %150 : vector<16x64xf32>
    %153 = arith.mulf %140, %152 : vector<16x64xf32>
    %154 = vector.extract_strided_slice %38 {offsets = [32, 0], sizes = [64, 32], strides = [1, 1]} : vector<96x64xf32> to vector<64x32xf32>
    %cst_52 = arith.constant dense<0.000000e+00> : vector<16x32xf32>
    %155 = tpu.matmul %153, %154, %cst_52 {dimension_numbers = #tpu.dot_dimension_numbers<[1], [0], [0], [1], [0, 0, 1, 1], [], []>} : vector<16x64xf32>, vector<64x32xf32>, vector<16x32xf32> -> vector<16x32xf32>
    %156 = vector.extract_strided_slice %40 {offsets = [3, 0], sizes = [1, 32], strides = [1, 1]} : vector<4x96xf32> to vector<1x32xf32>
    %157 = vector.broadcast %156 : vector<1x32xf32> to vector<16x32xf32>
    %158 = arith.addf %155, %157 : vector<16x32xf32>
    %159 = arith.addf %135, %158 : vector<16x32xf32>
    %160 = vector.extract_strided_slice %40 {offsets = [3, 32], sizes = [1, 32], strides = [1, 1]} : vector<4x96xf32> to vector<1x32xf32>
    %161 = vector.extract_strided_slice %40 {offsets = [3, 64], sizes = [1, 32], strides = [1, 1]} : vector<4x96xf32> to vector<1x32xf32>
    %cst_53 = arith.constant dense<0.000000e+00> : vector<16xf32>
    %162 = vector.multi_reduction <add>, %159, %cst_53 [1] : vector<16x32xf32> to vector<16xf32>
    %163 = vector.shape_cast %162 : vector<16xf32> to vector<16x1xf32>
    %cst_54 = arith.constant 3.200000e+01 : f32
    %164 = vector.broadcast %cst_54 : f32 to vector<16x1xf32>
    %165 = arith.divf %163, %164 : vector<16x1xf32>
    %166 = vector.broadcast %165 : vector<16x1xf32> to vector<16x32xf32>
    %167 = arith.subf %159, %166 : vector<16x32xf32>
    %168 = arith.mulf %167, %167 : vector<16x32xf32>
    %cst_55 = arith.constant dense<0.000000e+00> : vector<16xf32>
    %169 = vector.multi_reduction <add>, %168, %cst_55 [1] : vector<16x32xf32> to vector<16xf32>
    %170 = vector.shape_cast %169 : vector<16xf32> to vector<16x1xf32>
    %cst_56 = arith.constant 3.200000e+01 : f32
    %171 = vector.broadcast %cst_56 : f32 to vector<16x1xf32>
    %172 = arith.divf %170, %171 : vector<16x1xf32>
    %173 = vector.broadcast %165 : vector<16x1xf32> to vector<16x32xf32>
    %174 = arith.subf %159, %173 : vector<16x32xf32>
    %cst_57 = arith.constant 9.99999996E-13 : f32
    %175 = vector.broadcast %cst_57 : f32 to vector<16x1xf32>
    %176 = arith.addf %172, %175 : vector<16x1xf32>
    %177 = math.rsqrt %176 : vector<16x1xf32>
    %178 = vector.broadcast %177 : vector<16x1xf32> to vector<16x32xf32>
    %179 = arith.mulf %174, %178 : vector<16x32xf32>
    %180 = vector.broadcast %160 : vector<1x32xf32> to vector<16x32xf32>
    %181 = arith.mulf %179, %180 : vector<16x32xf32>
    %182 = vector.broadcast %161 : vector<1x32xf32> to vector<16x32xf32>
    %183 = arith.addf %181, %182 : vector<16x32xf32>
    %c1_58 = arith.constant 1 : index
    %c0_59 = arith.constant 0 : index
    %c0_60 = arith.constant 0 : index
    %184 = vector.load %arg5[%c1_58, %c0_59, %c0_60] : memref<2x32x128xf32, #tpu.memory_space<vmem>>, vector<1x32x128xf32>
    %185 = vector.shape_cast %184 : vector<1x32x128xf32> to vector<32x128xf32>
    %c1_61 = arith.constant 1 : index
    %c0_62 = arith.constant 0 : index
    %c0_63 = arith.constant 0 : index
    %186 = vector.load %arg6[%c1_61, %c0_62, %c0_63] : memref<2x96x64xf32, #tpu.memory_space<vmem>>, vector<1x96x64xf32>
    %187 = vector.shape_cast %186 : vector<1x96x64xf32> to vector<96x64xf32>
    %c1_64 = arith.constant 1 : index
    %c0_65 = arith.constant 0 : index
    %c0_66 = arith.constant 0 : index
    %188 = vector.load %arg7[%c1_64, %c0_65, %c0_66] : memref<2x4x96xf32, #tpu.memory_space<vmem>>, vector<1x4x96xf32>
    %189 = vector.shape_cast %188 : vector<1x4x96xf32> to vector<4x96xf32>
    %190 = vector.extract_strided_slice %185 {offsets = [0, 0], sizes = [32, 96], strides = [1, 1]} : vector<32x128xf32> to vector<32x96xf32>
    %cst_67 = arith.constant dense<0.000000e+00> : vector<16x96xf32>
    %191 = tpu.matmul %183, %190, %cst_67 {dimension_numbers = #tpu.dot_dimension_numbers<[1], [0], [0], [1], [0, 0, 1, 1], [], []>} : vector<16x32xf32>, vector<32x96xf32>, vector<16x96xf32> -> vector<16x96xf32>
    %192 = vector.extract_strided_slice %189 {offsets = [0, 0], sizes = [1, 96], strides = [1, 1]} : vector<4x96xf32> to vector<1x96xf32>
    %193 = vector.broadcast %192 : vector<1x96xf32> to vector<16x96xf32>
    %194 = arith.addf %191, %193 : vector<16x96xf32>
    %195 = vector.extract_strided_slice %194 {offsets = [0, 0], sizes = [16, 32], strides = [1, 1]} : vector<16x96xf32> to vector<16x32xf32>
    %196 = vector.extract_strided_slice %194 {offsets = [0, 32], sizes = [16, 32], strides = [1, 1]} : vector<16x96xf32> to vector<16x32xf32>
    %197 = vector.extract_strided_slice %194 {offsets = [0, 64], sizes = [16, 32], strides = [1, 1]} : vector<16x96xf32> to vector<16x32xf32>
    %198 = vector.extract_strided_slice %195 {offsets = [0, 0], sizes = [16, 8], strides = [1, 1]} : vector<16x32xf32> to vector<16x8xf32>
    %199 = vector.extract_strided_slice %196 {offsets = [0, 0], sizes = [16, 8], strides = [1, 1]} : vector<16x32xf32> to vector<16x8xf32>
    %cst_68 = arith.constant dense<0.000000e+00> : vector<16x16xf32>
    %200 = tpu.matmul %198, %199, %cst_68 {dimension_numbers = #tpu.dot_dimension_numbers<[1], [1], [0], [0], [0, 0, 1, 0], [], []>} : vector<16x8xf32>, vector<16x8xf32>, vector<16x16xf32> -> vector<16x16xf32>
    %cst_69 = arith.constant 0.353553385 : f32
    %201 = vector.broadcast %cst_69 : f32 to vector<16x16xf32>
    %202 = arith.mulf %200, %201 : vector<16x16xf32>
    %203 = arith.addf %202, %34 : vector<16x16xf32>
    %204 = math.exp %203 : vector<16x16xf32>
    %cst_70 = arith.constant dense<0.000000e+00> : vector<16xf32>
    %205 = vector.multi_reduction <add>, %204, %cst_70 [1] : vector<16x16xf32> to vector<16xf32>
    %206 = vector.shape_cast %205 : vector<16xf32> to vector<16x1xf32>
    %207 = tpu.reciprocal %206 {approx = true} : vector<16x1xf32> -> vector<16x1xf32>
    %208 = vector.broadcast %207 : vector<16x1xf32> to vector<16x16xf32>
    %209 = arith.mulf %204, %208 : vector<16x16xf32>
    %210 = vector.extract_strided_slice %197 {offsets = [0, 0], sizes = [16, 8], strides = [1, 1]} : vector<16x32xf32> to vector<16x8xf32>
    %cst_71 = arith.constant dense<0.000000e+00> : vector<16x8xf32>
    %211 = tpu.matmul %209, %210, %cst_71 {dimension_numbers = #tpu.dot_dimension_numbers<[1], [0], [0], [1], [0, 0, 1, 1], [], []>} : vector<16x16xf32>, vector<16x8xf32>, vector<16x8xf32> -> vector<16x8xf32>
    %212 = vector.extract_strided_slice %195 {offsets = [0, 8], sizes = [16, 8], strides = [1, 1]} : vector<16x32xf32> to vector<16x8xf32>
    %213 = vector.extract_strided_slice %196 {offsets = [0, 8], sizes = [16, 8], strides = [1, 1]} : vector<16x32xf32> to vector<16x8xf32>
    %cst_72 = arith.constant dense<0.000000e+00> : vector<16x16xf32>
    %214 = tpu.matmul %212, %213, %cst_72 {dimension_numbers = #tpu.dot_dimension_numbers<[1], [1], [0], [0], [0, 0, 1, 0], [], []>} : vector<16x8xf32>, vector<16x8xf32>, vector<16x16xf32> -> vector<16x16xf32>
    %cst_73 = arith.constant 0.353553385 : f32
    %215 = vector.broadcast %cst_73 : f32 to vector<16x16xf32>
    %216 = arith.mulf %214, %215 : vector<16x16xf32>
    %217 = arith.addf %216, %34 : vector<16x16xf32>
    %218 = math.exp %217 : vector<16x16xf32>
    %cst_74 = arith.constant dense<0.000000e+00> : vector<16xf32>
    %219 = vector.multi_reduction <add>, %218, %cst_74 [1] : vector<16x16xf32> to vector<16xf32>
    %220 = vector.shape_cast %219 : vector<16xf32> to vector<16x1xf32>
    %221 = tpu.reciprocal %220 {approx = true} : vector<16x1xf32> -> vector<16x1xf32>
    %222 = vector.broadcast %221 : vector<16x1xf32> to vector<16x16xf32>
    %223 = arith.mulf %218, %222 : vector<16x16xf32>
    %224 = vector.extract_strided_slice %197 {offsets = [0, 8], sizes = [16, 8], strides = [1, 1]} : vector<16x32xf32> to vector<16x8xf32>
    %cst_75 = arith.constant dense<0.000000e+00> : vector<16x8xf32>
    %225 = tpu.matmul %223, %224, %cst_75 {dimension_numbers = #tpu.dot_dimension_numbers<[1], [0], [0], [1], [0, 0, 1, 1], [], []>} : vector<16x16xf32>, vector<16x8xf32>, vector<16x8xf32> -> vector<16x8xf32>
    %226 = vector.extract_strided_slice %195 {offsets = [0, 16], sizes = [16, 8], strides = [1, 1]} : vector<16x32xf32> to vector<16x8xf32>
    %227 = vector.extract_strided_slice %196 {offsets = [0, 16], sizes = [16, 8], strides = [1, 1]} : vector<16x32xf32> to vector<16x8xf32>
    %cst_76 = arith.constant dense<0.000000e+00> : vector<16x16xf32>
    %228 = tpu.matmul %226, %227, %cst_76 {dimension_numbers = #tpu.dot_dimension_numbers<[1], [1], [0], [0], [0, 0, 1, 0], [], []>} : vector<16x8xf32>, vector<16x8xf32>, vector<16x16xf32> -> vector<16x16xf32>
    %cst_77 = arith.constant 0.353553385 : f32
    %229 = vector.broadcast %cst_77 : f32 to vector<16x16xf32>
    %230 = arith.mulf %228, %229 : vector<16x16xf32>
    %231 = arith.addf %230, %34 : vector<16x16xf32>
    %232 = math.exp %231 : vector<16x16xf32>
    %cst_78 = arith.constant dense<0.000000e+00> : vector<16xf32>
    %233 = vector.multi_reduction <add>, %232, %cst_78 [1] : vector<16x16xf32> to vector<16xf32>
    %234 = vector.shape_cast %233 : vector<16xf32> to vector<16x1xf32>
    %235 = tpu.reciprocal %234 {approx = true} : vector<16x1xf32> -> vector<16x1xf32>
    %236 = vector.broadcast %235 : vector<16x1xf32> to vector<16x16xf32>
    %237 = arith.mulf %232, %236 : vector<16x16xf32>
    %238 = vector.extract_strided_slice %197 {offsets = [0, 16], sizes = [16, 8], strides = [1, 1]} : vector<16x32xf32> to vector<16x8xf32>
    %cst_79 = arith.constant dense<0.000000e+00> : vector<16x8xf32>
    %239 = tpu.matmul %237, %238, %cst_79 {dimension_numbers = #tpu.dot_dimension_numbers<[1], [0], [0], [1], [0, 0, 1, 1], [], []>} : vector<16x16xf32>, vector<16x8xf32>, vector<16x8xf32> -> vector<16x8xf32>
    %240 = vector.extract_strided_slice %195 {offsets = [0, 24], sizes = [16, 8], strides = [1, 1]} : vector<16x32xf32> to vector<16x8xf32>
    %241 = vector.extract_strided_slice %196 {offsets = [0, 24], sizes = [16, 8], strides = [1, 1]} : vector<16x32xf32> to vector<16x8xf32>
    %cst_80 = arith.constant dense<0.000000e+00> : vector<16x16xf32>
    %242 = tpu.matmul %240, %241, %cst_80 {dimension_numbers = #tpu.dot_dimension_numbers<[1], [1], [0], [0], [0, 0, 1, 0], [], []>} : vector<16x8xf32>, vector<16x8xf32>, vector<16x16xf32> -> vector<16x16xf32>
    %cst_81 = arith.constant 0.353553385 : f32
    %243 = vector.broadcast %cst_81 : f32 to vector<16x16xf32>
    %244 = arith.mulf %242, %243 : vector<16x16xf32>
    %245 = arith.addf %244, %34 : vector<16x16xf32>
    %246 = math.exp %245 : vector<16x16xf32>
    %cst_82 = arith.constant dense<0.000000e+00> : vector<16xf32>
    %247 = vector.multi_reduction <add>, %246, %cst_82 [1] : vector<16x16xf32> to vector<16xf32>
    %248 = vector.shape_cast %247 : vector<16xf32> to vector<16x1xf32>
    %249 = tpu.reciprocal %248 {approx = true} : vector<16x1xf32> -> vector<16x1xf32>
    %250 = vector.broadcast %249 : vector<16x1xf32> to vector<16x16xf32>
    %251 = arith.mulf %246, %250 : vector<16x16xf32>
    %252 = vector.extract_strided_slice %197 {offsets = [0, 24], sizes = [16, 8], strides = [1, 1]} : vector<16x32xf32> to vector<16x8xf32>
    %cst_83 = arith.constant dense<0.000000e+00> : vector<16x8xf32>
    %253 = tpu.matmul %251, %252, %cst_83 {dimension_numbers = #tpu.dot_dimension_numbers<[1], [0], [0], [1], [0, 0, 1, 1], [], []>} : vector<16x16xf32>, vector<16x8xf32>, vector<16x8xf32> -> vector<16x8xf32>
    %254 = tpu.concatenate %211, %225, %239, %253 in 1 : vector<16x8xf32>, vector<16x8xf32>, vector<16x8xf32>, vector<16x8xf32> -> vector<16x32xf32>
    %255 = vector.extract_strided_slice %185 {offsets = [0, 96], sizes = [32, 32], strides = [1, 1]} : vector<32x128xf32> to vector<32x32xf32>
    %cst_84 = arith.constant dense<0.000000e+00> : vector<16x32xf32>
    %256 = tpu.matmul %254, %255, %cst_84 {dimension_numbers = #tpu.dot_dimension_numbers<[1], [0], [0], [1], [0, 0, 1, 1], [], []>} : vector<16x32xf32>, vector<32x32xf32>, vector<16x32xf32> -> vector<16x32xf32>
    %257 = vector.extract_strided_slice %189 {offsets = [1, 0], sizes = [1, 32], strides = [1, 1]} : vector<4x96xf32> to vector<1x32xf32>
    %258 = vector.broadcast %257 : vector<1x32xf32> to vector<16x32xf32>
    %259 = arith.addf %256, %258 : vector<16x32xf32>
    %260 = arith.addf %183, %259 : vector<16x32xf32>
    %261 = vector.extract_strided_slice %189 {offsets = [1, 32], sizes = [1, 32], strides = [1, 1]} : vector<4x96xf32> to vector<1x32xf32>
    %262 = vector.extract_strided_slice %189 {offsets = [1, 64], sizes = [1, 32], strides = [1, 1]} : vector<4x96xf32> to vector<1x32xf32>
    %cst_85 = arith.constant dense<0.000000e+00> : vector<16xf32>
    %263 = vector.multi_reduction <add>, %260, %cst_85 [1] : vector<16x32xf32> to vector<16xf32>
    %264 = vector.shape_cast %263 : vector<16xf32> to vector<16x1xf32>
    %cst_86 = arith.constant 3.200000e+01 : f32
    %265 = vector.broadcast %cst_86 : f32 to vector<16x1xf32>
    %266 = arith.divf %264, %265 : vector<16x1xf32>
    %267 = vector.broadcast %266 : vector<16x1xf32> to vector<16x32xf32>
    %268 = arith.subf %260, %267 : vector<16x32xf32>
    %269 = arith.mulf %268, %268 : vector<16x32xf32>
    %cst_87 = arith.constant dense<0.000000e+00> : vector<16xf32>
    %270 = vector.multi_reduction <add>, %269, %cst_87 [1] : vector<16x32xf32> to vector<16xf32>
    %271 = vector.shape_cast %270 : vector<16xf32> to vector<16x1xf32>
    %cst_88 = arith.constant 3.200000e+01 : f32
    %272 = vector.broadcast %cst_88 : f32 to vector<16x1xf32>
    %273 = arith.divf %271, %272 : vector<16x1xf32>
    %274 = vector.broadcast %266 : vector<16x1xf32> to vector<16x32xf32>
    %275 = arith.subf %260, %274 : vector<16x32xf32>
    %cst_89 = arith.constant 9.99999996E-13 : f32
    %276 = vector.broadcast %cst_89 : f32 to vector<16x1xf32>
    %277 = arith.addf %273, %276 : vector<16x1xf32>
    %278 = math.rsqrt %277 : vector<16x1xf32>
    %279 = vector.broadcast %278 : vector<16x1xf32> to vector<16x32xf32>
    %280 = arith.mulf %275, %279 : vector<16x32xf32>
    %281 = vector.broadcast %261 : vector<1x32xf32> to vector<16x32xf32>
    %282 = arith.mulf %280, %281 : vector<16x32xf32>
    %283 = vector.broadcast %262 : vector<1x32xf32> to vector<16x32xf32>
    %284 = arith.addf %282, %283 : vector<16x32xf32>
    %285 = vector.extract_strided_slice %187 {offsets = [0, 0], sizes = [32, 64], strides = [1, 1]} : vector<96x64xf32> to vector<32x64xf32>
    %cst_90 = arith.constant dense<0.000000e+00> : vector<16x64xf32>
    %286 = tpu.matmul %284, %285, %cst_90 {dimension_numbers = #tpu.dot_dimension_numbers<[1], [0], [0], [1], [0, 0, 1, 1], [], []>} : vector<16x32xf32>, vector<32x64xf32>, vector<16x64xf32> -> vector<16x64xf32>
    %287 = vector.extract_strided_slice %189 {offsets = [2, 0], sizes = [1, 64], strides = [1, 1]} : vector<4x96xf32> to vector<1x64xf32>
    %288 = vector.broadcast %287 : vector<1x64xf32> to vector<16x64xf32>
    %289 = arith.addf %286, %288 : vector<16x64xf32>
    %290 = arith.mulf %289, %289 : vector<16x64xf32>
    %291 = arith.mulf %289, %290 : vector<16x64xf32>
    %cst_91 = arith.constant 4.471500e-02 : f32
    %292 = vector.broadcast %cst_91 : f32 to vector<16x64xf32>
    %293 = arith.mulf %292, %291 : vector<16x64xf32>
    %294 = arith.addf %289, %293 : vector<16x64xf32>
    %cst_92 = arith.constant 0.797884583 : f32
    %295 = vector.broadcast %cst_92 : f32 to vector<16x64xf32>
    %296 = arith.mulf %295, %294 : vector<16x64xf32>
    %297 = math.tanh %296 : vector<16x64xf32>
    %cst_93 = arith.constant 1.000000e+00 : f32
    %298 = vector.broadcast %cst_93 : f32 to vector<16x64xf32>
    %299 = arith.addf %298, %297 : vector<16x64xf32>
    %cst_94 = arith.constant 5.000000e-01 : f32
    %300 = vector.broadcast %cst_94 : f32 to vector<16x64xf32>
    %301 = arith.mulf %300, %299 : vector<16x64xf32>
    %302 = arith.mulf %289, %301 : vector<16x64xf32>
    %303 = vector.extract_strided_slice %187 {offsets = [32, 0], sizes = [64, 32], strides = [1, 1]} : vector<96x64xf32> to vector<64x32xf32>
    %cst_95 = arith.constant dense<0.000000e+00> : vector<16x32xf32>
    %304 = tpu.matmul %302, %303, %cst_95 {dimension_numbers = #tpu.dot_dimension_numbers<[1], [0], [0], [1], [0, 0, 1, 1], [], []>} : vector<16x64xf32>, vector<64x32xf32>, vector<16x32xf32> -> vector<16x32xf32>
    %305 = vector.extract_strided_slice %189 {offsets = [3, 0], sizes = [1, 32], strides = [1, 1]} : vector<4x96xf32> to vector<1x32xf32>
    %306 = vector.broadcast %305 : vector<1x32xf32> to vector<16x32xf32>
    %307 = arith.addf %304, %306 : vector<16x32xf32>
    %308 = arith.addf %284, %307 : vector<16x32xf32>
    %309 = vector.extract_strided_slice %189 {offsets = [3, 32], sizes = [1, 32], strides = [1, 1]} : vector<4x96xf32> to vector<1x32xf32>
    %310 = vector.extract_strided_slice %189 {offsets = [3, 64], sizes = [1, 32], strides = [1, 1]} : vector<4x96xf32> to vector<1x32xf32>
    %cst_96 = arith.constant dense<0.000000e+00> : vector<16xf32>
    %311 = vector.multi_reduction <add>, %308, %cst_96 [1] : vector<16x32xf32> to vector<16xf32>
    %312 = vector.shape_cast %311 : vector<16xf32> to vector<16x1xf32>
    %cst_97 = arith.constant 3.200000e+01 : f32
    %313 = vector.broadcast %cst_97 : f32 to vector<16x1xf32>
    %314 = arith.divf %312, %313 : vector<16x1xf32>
    %315 = vector.broadcast %314 : vector<16x1xf32> to vector<16x32xf32>
    %316 = arith.subf %308, %315 : vector<16x32xf32>
    %317 = arith.mulf %316, %316 : vector<16x32xf32>
    %cst_98 = arith.constant dense<0.000000e+00> : vector<16xf32>
    %318 = vector.multi_reduction <add>, %317, %cst_98 [1] : vector<16x32xf32> to vector<16xf32>
    %319 = vector.shape_cast %318 : vector<16xf32> to vector<16x1xf32>
    %cst_99 = arith.constant 3.200000e+01 : f32
    %320 = vector.broadcast %cst_99 : f32 to vector<16x1xf32>
    %321 = arith.divf %319, %320 : vector<16x1xf32>
    %322 = vector.broadcast %314 : vector<16x1xf32> to vector<16x32xf32>
    %323 = arith.subf %308, %322 : vector<16x32xf32>
    %cst_100 = arith.constant 9.99999996E-13 : f32
    %324 = vector.broadcast %cst_100 : f32 to vector<16x1xf32>
    %325 = arith.addf %321, %324 : vector<16x1xf32>
    %326 = math.rsqrt %325 : vector<16x1xf32>
    %327 = vector.broadcast %326 : vector<16x1xf32> to vector<16x32xf32>
    %328 = arith.mulf %323, %327 : vector<16x32xf32>
    %329 = vector.broadcast %309 : vector<1x32xf32> to vector<16x32xf32>
    %330 = arith.mulf %328, %329 : vector<16x32xf32>
    %331 = vector.broadcast %310 : vector<1x32xf32> to vector<16x32xf32>
    %332 = arith.addf %330, %331 : vector<16x32xf32>
    %c0_101 = arith.constant 0 : index
    %c0_102 = arith.constant 0 : index
    %333 = vector.load %arg8[%c0_101, %c0_102] : memref<32x34xf32, #tpu.memory_space<vmem>>, vector<32x32xf32>
    %cst_103 = arith.constant dense<0.000000e+00> : vector<16x32xf32>
    %334 = tpu.matmul %332, %333, %cst_103 {dimension_numbers = #tpu.dot_dimension_numbers<[1], [0], [0], [1], [0, 0, 1, 1], [], []>} : vector<16x32xf32>, vector<32x32xf32>, vector<16x32xf32> -> vector<16x32xf32>
    %c0_104 = arith.constant 0 : index
    %c0_105 = arith.constant 0 : index
    %335 = vector.load %arg9[%c0_104, %c0_105] : memref<1x34xf32, #tpu.memory_space<vmem>>, vector<1x32xf32>
    %336 = vector.broadcast %335 : vector<1x32xf32> to vector<16x32xf32>
    %337 = arith.addf %334, %336 : vector<16x32xf32>
    %338 = math.tanh %337 : vector<16x32xf32>
    %c0_106 = arith.constant 0 : index
    %c32 = arith.constant 32 : index
    %339 = vector.load %arg8[%c0_106, %c32] : memref<32x34xf32, #tpu.memory_space<vmem>>, vector<32x2xf32>
    %cst_107 = arith.constant dense<0.000000e+00> : vector<16x2xf32>
    %340 = tpu.matmul %338, %339, %cst_107 {dimension_numbers = #tpu.dot_dimension_numbers<[1], [0], [0], [1], [0, 0, 1, 1], [], []>} : vector<16x32xf32>, vector<32x2xf32>, vector<16x2xf32> -> vector<16x2xf32>
    %c0_108 = arith.constant 0 : index
    %c32_109 = arith.constant 32 : index
    %341 = vector.load %arg9[%c0_108, %c32_109] : memref<1x34xf32, #tpu.memory_space<vmem>>, vector<1x2xf32>
    %342 = vector.broadcast %341 : vector<1x2xf32> to vector<16x2xf32>
    %343 = arith.addf %340, %342 : vector<16x2xf32>
    %c0_110 = arith.constant 0 : index
    %c0_111 = arith.constant 0 : index
    %344 = vector.load %arg10[%c0_110, %c0_111] : memref<16x2xf32, #tpu.memory_space<vmem>>, vector<16x2xf32>
    tpu.vector_store %arg10[%c0_110, %c0_111], %343 {strides = array<i32>} : memref<16x2xf32, #tpu.memory_space<vmem>>, vector<16x2xf32>,
    return
  }
}

</mosaic_0001>

<llo_original>
// kernel: eq.8
$region0: #{eq.8}
  %s0 = inlined_call_operand.vmem [shape: s32[2,8], index: 0, kind: input, shape index: {}]
  %s1 = inlined_call_operand.vmem [shape: s32[16], index: 1, kind: output, shape index: {}]
  $region1: #{eq.8} parent=0
    #allocation0 [shape = 'u8[4096]{0}', space=vmem, size = 0x1000, scoped, tag = 'scoped mem for output reshape']
    #allocation1 [shape = 'u8[4096]{0}', space=vmem, size = 0x1000, scoped, tag = 'scoped mem for input reshape']
    %s3 = ssub.s32 4, 1
    %v4 = vld [vmem:[%s0] sm:%s3]
    %5 = vst [vmem:[#allocation1] sm:%s3] %v4
    %v6 = vld [vmem:[#allocation1] sm:$0x1]
    %vm7 = vcmask 64512
    %8 = vst.msk [vmem:[#allocation0] sm:$0x1] %vm7, %v6
    %s9 = scalar_lea.vmem [#allocation1], 1
    %v10 = vld [vmem:[%s9] sm:$0x1]
    %11 = vrot.lane.b32.xlu0 %v10, 8
    %v12 = vpop.permute.xlu0 %11
    %vm13 = vcmask 130112
    %14 = vst.msk [vmem:[#allocation0] sm:$0x1] %vm13, %v12
    %s16 = ssub.s32 2, 1
    %v17 = vld [vmem:[#allocation0] sm:%s16]
    %s19 = ssub.s32 2, 1
    %20 = vst [vmem:[%s1] sm:%s19] %v17

// kernel: bert_absa_forward.1
$region0: #{bert_absa_forward.1}
  #allocation0 [shape = 'u32[]', space=smem, size = 0x4, offset = 0x4, fixed_abs, tag = 'smem constant byte address 0x4 - core index']
  #allocation1 [shape = 'u32[72,128]{1,0:T(1,128)}', space=vmem, size = 0x9000, scoped, tag = 'internal scratch']
  %s0 = inlined_call_operand.vmem [shape: s32[16,1], index: 0, kind: input, shape index: {}]
  %s1 = inlined_call_operand.vmem [shape: f32[16,16], index: 1, kind: input, shape index: {}]
  %s2 = inlined_call_operand.vmem [shape: f32[16,32], index: 2, kind: input, shape index: {}]
  %s3 = inlined_call_operand.vmem [shape: f32[128,32], index: 3, kind: input, shape index: {}]
  %s4 = inlined_call_operand.vmem [shape: f32[2,32], index: 4, kind: input, shape index: {}]
  %s5 = inlined_call_operand.vmem [shape: f32[2,32,128], index: 5, kind: input, shape index: {}]
  %s6 = inlined_call_operand.vmem [shape: f32[2,96,64], index: 6, kind: input, shape index: {}]
  %s7 = inlined_call_operand.vmem [shape: f32[2,4,96], index: 7, kind: input, shape index: {}]
  %s8 = inlined_call_operand.vmem [shape: f32[32,34], index: 8, kind: input, shape index: {}]
  %s9 = inlined_call_operand.vmem [shape: f32[1,34], index: 9, kind: input, shape index: {}]
  %s10 = inlined_call_operand.vmem [shape: f32[16,2], index: 10, kind: output, shape index: {}]
  %s11 = sld [smem:[#allocation0]]
  $region50: #{bert_absa_forward.1} parent=0
    _
  %s13 = ssub.s32 1, %s11
  %s14 = scalar_select 0, %s13, %s11
  // Predicated region
  $region2: #{bert_absa_forward.1} parent=0 // pred_check
    _
  $region3: #{bert_absa_forward.1} parent=0 // pred_check_branch
    %16 = sbr.rel (0) target = $region5
  $region4: #{bert_absa_forward.1} parent=0 // pred_region
    _
  $region5: #{bert_absa_forward.1} parent=0 // pred_fallthru
    _
  // Predicated region
  $region6: #{bert_absa_forward.1} parent=0 // pred_check
    _
  $region7: #{bert_absa_forward.1} parent=0 // pred_check_branch
    %18 = sbr.rel (0) target = $region9
  $region8: #{bert_absa_forward.1} parent=0 // pred_region
    _
  $region9: #{bert_absa_forward.1} parent=0 // pred_fallthru
    _
  // Predicated region
  $region10: #{bert_absa_forward.1} parent=0 // pred_check
    _
  $region11: #{bert_absa_forward.1} parent=0 // pred_check_branch
    %20 = sbr.rel (0) target = $region13
  $region12: #{bert_absa_forward.1} parent=0 // pred_region
    _
  $region13: #{bert_absa_forward.1} parent=0 // pred_fallthru
    _
  // Predicated region
  $region14: #{bert_absa_forward.1} parent=0 // pred_check
    _
  $region15: #{bert_absa_forward.1} parent=0 // pred_check_branch
    %22 = sbr.rel (0) target = $region17
  $region16: #{bert_absa_forward.1} parent=0 // pred_region
    _
  $region17: #{bert_absa_forward.1} parent=0 // pred_fallthru
    _
  // Predicated region
  $region18: #{bert_absa_forward.1} parent=0 // pred_check
    _
  $region19: #{bert_absa_forward.1} parent=0 // pred_check_branch
    %24 = sbr.rel (0) target = $region21
  $region20: #{bert_absa_forward.1} parent=0 // pred_region
    _
  $region21: #{bert_absa_forward.1} parent=0 // pred_fallthru
    _
  // Predicated region
  $region22: #{bert_absa_forward.1} parent=0 // pred_check
    _
  $region23: #{bert_absa_forward.1} parent=0 // pred_check_branch
    %26 = sbr.rel (0) target = $region25
  $region24: #{bert_absa_forward.1} parent=0 // pred_region
    _
  $region25: #{bert_absa_forward.1} parent=0 // pred_fallthru
    _
  // Predicated region
  $region26: #{bert_absa_forward.1} parent=0 // pred_check
    _
  $region27: #{bert_absa_forward.1} parent=0 // pred_check_branch
    %28 = sbr.rel (0) target = $region29
  $region28: #{bert_absa_forward.1} parent=0 // pred_region
    _
  $region29: #{bert_absa_forward.1} parent=0 // pred_fallthru
    _
  // Predicated region
  $region30: #{bert_absa_forward.1} parent=0 // pred_check
    _
  $region31: #{bert_absa_forward.1} parent=0 // pred_check_branch
    %30 = sbr.rel (0) target = $region33
  $region32: #{bert_absa_forward.1} parent=0 // pred_region
    _
  $region33: #{bert_absa_forward.1} parent=0 // pred_fallthru
    _
  // Predicated region
  $region34: #{bert_absa_forward.1} parent=0 // pred_check
    _
  $region35: #{bert_absa_forward.1} parent=0 // pred_check_branch
    %32 = sbr.rel (0) target = $region37
  $region36: #{bert_absa_forward.1} parent=0 // pred_region
    _
  $region37: #{bert_absa_forward.1} parent=0 // pred_fallthru
    _
  // Predicated region
  $region38: #{bert_absa_forward.1} parent=0 // pred_check
    _
  $region39: #{bert_absa_forward.1} parent=0 // pred_check_branch
    %34 = sbr.rel (0) target = $region41
  $region40: #{bert_absa_forward.1} parent=0 // pred_region
    _
  $region41: #{bert_absa_forward.1} parent=0 // pred_fallthru
    _
  %v35 = vld [vmem:[%s0] sm:$0xff]
  %v36 = vld [vmem:[%s0 + $0x8] sm:$0xff]
  %v37 = vlaneseq
  %v38 = vand.u32 %v37, 127
  %39 = vset.pattern.permute.xlu0 0
  %40 = vperm.xlu0 %39, %v35
  %v41 = vpop.permute.xlu0 %40
  %42 = vset.pattern.permute.xlu0 0
  %43 = vperm.xlu0 %42, %v36
  %v44 = vpop.permute.xlu0 %43
  %vm45 = vcmp.eq.s32.totalorder %v38, %v41
  %vm46 = vcmp.eq.s32.totalorder %v38, %v44
  %v47 = vsel %vm45, 1, 0
  %v48 = vsel %vm46, 1, 0
  %v49 = vcvt.s32.f32 %v47
  %v50 = vcvt.s32.f32 %v48
  %v51 = vld [vmem:[%s3] sm:$0xff]
  %v52 = vld [vmem:[%s3 + $0x8] sm:$0xff]
  %v53 = vld [vmem:[%s3 + $0x10] sm:$0xff]
  %v54 = vld [vmem:[%s3 + $0x18] sm:$0xff]
  %v55 = vld [vmem:[%s3 + $0x20] sm:$0xff]
  %v56 = vld [vmem:[%s3 + $0x28] sm:$0xff]
  %v57 = vld [vmem:[%s3 + $0x30] sm:$0xff]
  %v58 = vld [vmem:[%s3 + $0x38] sm:$0xff]
  %v59 = vld [vmem:[%s3 + $0x40] sm:$0xff]
  %v60 = vld [vmem:[%s3 + $0x48] sm:$0xff]
  %v61 = vld [vmem:[%s3 + $0x50] sm:$0xff]
  %v62 = vld [vmem:[%s3 + $0x58] sm:$0xff]
  %v63 = vld [vmem:[%s3 + $0x60] sm:$0xff]
  %v64 = vld [vmem:[%s3 + $0x68] sm:$0xff]
  %v65 = vld [vmem:[%s3 + $0x70] sm:$0xff]
  %v66 = vld [vmem:[%s3 + $0x78] sm:$0xff]
  %v67 = vld [vmem:[%s2] sm:$0xff]
  %v68 = vld [vmem:[%s2 + $0x8] sm:$0xff]
  %69 = vmatpush.msra.mxu0 %v66
  %70 = vmatpush.msra.mxu0 %v65
  %71 = vmatpush.msra.mxu0 %v64
  %72 = vmatpush.msra.mxu0 %v63
  %73 = vmatpush.msra.mxu0 %v62
  %74 = vmatpush.msra.mxu0 %v61
  %75 = vmatpush.msra.mxu0 %v60
  %76 = vmatpush.msra.mxu0 %v59
  %77 = vmatpush.msra.mxu0 %v58
  %78 = vmatpush.msra.mxu0 %v57
  %79 = vmatpush.msra.mxu0 %v56
  %80 = vmatpush.msra.mxu0 %v55
  %81 = vmatpush.msra.mxu0 %v54
  %82 = vmatpush.msra.mxu0 %v53
  %83 = vmatpush.msra.mxu0 %v52
  %84 = vmatpush.msra.mxu0 %v51
  %85 = vmatmul.f32.gmra.mxu0 %v49
  %v86 = vpop.f32.mrf.mxu0
  %v87 = vadd.f32 %v67, %v86
  %88 = vmatmul.f32.gmra.mxu0 %v50
  %v89 = vpop.f32.mrf.mxu0
  %v90 = vadd.f32 %v68, %v89
  %91 = vdwg.mxu0
  %v92 = vld [vmem:[%s4] sm:$0x1]
  %v93 = vld [vmem:[%s4 + $0x1] sm:$0x1]
  %vm94 = vcmask 261120
  %v95 = vsel %vm94, %v87, 0.0
  %96 = vadd.xlane.f32.xlu0 %v95
  %v97 = vpop.xlane.xlu0 %96
  %v98 = vsel %vm94, %v90, 0.0
  %99 = vadd.xlane.f32.xlu0 %v98
  %v100 = vpop.xlane.xlu0 %99
  %v101 = vrcp.pop 32.0
  %v102 = vmul.f32 32.0, %v101
  %v103 = vsub.f32 1.0, %v102
  %v104 = vmul.f32 %v101, %v103
  %v105 = vadd.f32 %v101, %v104
  %vm106 = vweird.f32 %v101
  %v107 = vsel %vm106, %v101, %v105
  %v108 = vmul.f32 %v97, %v107
  %v109 = vmul.f32 %v100, %v107
  %v110 = vsub.f32 %v87, %v108
  %v111 = vsub.f32 %v90, %v109
  %v112 = vmul.f32 %v110, %v110
  %v113 = vmul.f32 %v111, %v111
  %v114 = vsel %vm94, %v112, 0.0
  %115 = vadd.xlane.f32.xlu0 %v114
  %v116 = vpop.xlane.xlu0 %115
  %v117 = vsel %vm94, %v113, 0.0
  %118 = vadd.xlane.f32.xlu0 %v117
  %v119 = vpop.xlane.xlu0 %118
  %v120 = vmul.f32 %v116, %v107
  %v121 = vmul.f32 %v119, %v107
  %v122 = vadd.f32 %v120, 1e-12
  %v123 = vadd.f32 %v121, 1e-12
  %v124 = vrsqrt.pop %v122
  %v125 = vmul.f32 %v124, %v122
  %v126 = vmul.f32 %v125, %v124
  %v127 = vmul.f32 0.5, %v126
  %v128 = vsub.f32 1.5, %v127
  %v129 = vmul.f32 %v124, %v128
  %vm130 = vweird.f32 %v122
  %vm131 = vweird.f32 %v124
  %vm132 = vmor %vm130, %vm131
  %v133 = vsel %vm132, %v124, %v129
  %v134 = vrsqrt.pop %v123
  %v135 = vmul.f32 %v134, %v123
  %v136 = vmul.f32 %v135, %v134
  %v137 = vmul.f32 0.5, %v136
  %v138 = vsub.f32 1.5, %v137
  %v139 = vmul.f32 %v134, %v138
  %vm140 = vweird.f32 %v123
  %vm141 = vweird.f32 %v134
  %vm142 = vmor %vm140, %vm141
  %v143 = vsel %vm142, %v134, %v139
  %v144 = vmul.f32 %v110, %v133
  %v145 = vmul.f32 %v111, %v143
  %v146 = vperm.slane %v92, 0
  %v147 = vmul.f32 %v144, %v146
  %v148 = vmul.f32 %v145, %v146
  %v149 = vperm.slane %v93, 0
  %v150 = vadd.f32 %v147, %v149
  %v151 = vadd.f32 %v148, %v149
  %v152 = vld [vmem:[%s1] sm:$0xff]
  %v153 = vld [vmem:[%s1 + $0x8] sm:$0xff]
  %v154 = vld [vmem:[%s5] sm:$0xff]
  %v155 = vld [vmem:[%s5 + $0x8] sm:$0xff]
  %v156 = vld [vmem:[%s5 + $0x10] sm:$0xff]
  %v157 = vld [vmem:[%s5 + $0x18] sm:$0xff]
  %v158 = vld [vmem:[%s6] sm:$0xff]
  %v159 = vld [vmem:[%s6 + $0x8] sm:$0xff]
  %v160 = vld [vmem:[%s6 + $0x10] sm:$0xff]
  %v161 = vld [vmem:[%s6 + $0x18] sm:$0xff]
  %v162 = vld [vmem:[%s6 + $0x20] sm:$0xff]
  %v163 = vld [vmem:[%s6 + $0x28] sm:$0xff]
  %v164 = vld [vmem:[%s6 + $0x30] sm:$0xff]
  %v165 = vld [vmem:[%s6 + $0x38] sm:$0xff]
  %v166 = vld [vmem:[%s6 + $0x40] sm:$0xff]
  %v167 = vld [vmem:[%s6 + $0x48] sm:$0xff]
  %v168 = vld [vmem:[%s6 + $0x50] sm:$0xff]
  %v169 = vld [vmem:[%s6 + $0x58] sm:$0xff]
  %v170 = vld [vmem:[%s7] sm:$0xf]
  %v171 = vperm.slane %v170, 0
  %v173 = vsel %vm94, %v150, 0
  %v176 = vsel %vm94, %v151, 0
  %178 = vmatpush.msra.mxu0 0.0
  %179 = vmatpush.msra.mxu0 0.0
  %180 = vmatpush.msra.mxu0 0.0
  %181 = vmatpush.msra.mxu0 0.0
  %182 = vmatpush.msra.mxu0 0.0
  %183 = vmatpush.msra.mxu0 0.0
  %184 = vmatpush.msra.mxu0 0.0
  %185 = vmatpush.msra.mxu0 0.0
  %186 = vmatpush.msra.mxu0 0.0
  %187 = vmatpush.msra.mxu0 0.0
  %188 = vmatpush.msra.mxu0 0.0
  %189 = vmatpush.msra.mxu0 0.0
  %190 = vmatpush.msra.mxu0 %v157
  %191 = vmatpush.msra.mxu0 %v156
  %192 = vmatpush.msra.mxu0 %v155
  %193 = vmatpush.msra.mxu0 %v154
  %194 = vmatmul.f32.gmra.mxu0 %v173
  %v195 = vpop.f32.mrf.mxu0
  %v196 = vadd.f32 %v171, %v195
  %197 = vmatmul.f32.gmra.mxu0 %v176
  %v198 = vpop.f32.mrf.mxu0
  %v199 = vadd.f32 %v171, %v198
  %200 = vdwg.mxu0
  %203 = vrot.lane.b32.xlu0 %v196, 96
  %v204 = vpop.permute.xlu0 %203
  %205 = vrot.lane.b32.xlu0 %v199, 96
  %v206 = vpop.permute.xlu0 %205
  %vm207 = vcmask 64512
  %v208 = vsel %vm207, %v196, 0
  %v210 = vsel %vm207, %v199, 0
  %v212 = vsel %vm207, %v204, 0
  %v214 = vsel %vm207, %v206, 0
  %216 = vmatpush.xpose.msra.mxu0 0.0
  %217 = vmatpush.xpose.msra.mxu0 0.0
  %218 = vmatpush.xpose.msra.mxu0 0.0
  %219 = vmatpush.xpose.msra.mxu0 0.0
  %220 = vmatpush.xpose.msra.mxu0 0.0
  %221 = vmatpush.xpose.msra.mxu0 0.0
  %222 = vmatpush.xpose.msra.mxu0 0.0
  %223 = vmatpush.xpose.msra.mxu0 0.0
  %224 = vmatpush.xpose.msra.mxu0 0.0
  %225 = vmatpush.xpose.msra.mxu0 0.0
  %226 = vmatpush.xpose.msra.mxu0 0.0
  %227 = vmatpush.xpose.msra.mxu0 0.0
  %228 = vmatpush.xpose.msra.mxu0 0.0
  %229 = vmatpush.xpose.msra.mxu0 0.0
  %230 = vmatpush.xpose.msra.mxu0 %v214
  %231 = vmatpush.xpose.msra.mxu0 %v212
  %232 = vmatmul.f32.gmra.mxu0 %v208
  %v233 = vpop.f32.mrf.mxu0
  %v234 = vadd.f32 0.0, %v233
  %235 = vmatmul.f32.gmra.mxu0 %v210
  %v236 = vpop.f32.mrf.mxu0
  %v237 = vadd.f32 0.0, %v236
  %238 = vdwg.mxu0
  %v239 = vmul.f32 %v234, 0.35355338
  %v240 = vmul.f32 %v237, 0.35355338
  %v241 = vadd.f32 %v239, %v152
  %v242 = vadd.f32 %v240, %v153
  %v243 = vmul.f32 %v241, 1.442695
  %v244 = vpow.pop %v243
  %v245 = vmul.f32 %v242, 1.442695
  %v246 = vpow.pop %v245
  %vm247 = vcmask 130048
  %v248 = vsel %vm247, %v244, 0.0
  %249 = vadd.xlane.f32.xlu0 %v248
  %v250 = vpop.xlane.xlu0 %249
  %v251 = vsel %vm247, %v246, 0.0
  %252 = vadd.xlane.f32.xlu0 %v251
  %v253 = vpop.xlane.xlu0 %252
  %v254 = vrcp.pop %v250
  %v255 = vrcp.pop %v253
  %v256 = vmul.f32 %v244, %v254
  %v257 = vmul.f32 %v246, %v255
  %258 = vrot.lane.b32.xlu0 %v196, 64
  %v259 = vpop.permute.xlu0 %258
  %260 = vrot.lane.b32.xlu0 %v199, 64
  %v261 = vpop.permute.xlu0 %260
  %v265 = vsel %vm247, %v256, 0
  %v268 = vsel %vm247, %v257, 0
  %270 = vmatpush.msra.mxu0 0.0
  %271 = vmatpush.msra.mxu0 0.0
  %272 = vmatpush.msra.mxu0 0.0
  %273 = vmatpush.msra.mxu0 0.0
  %274 = vmatpush.msra.mxu0 0.0
  %275 = vmatpush.msra.mxu0 0.0
  %276 = vmatpush.msra.mxu0 0.0
  %277 = vmatpush.msra.mxu0 0.0
  %278 = vmatpush.msra.mxu0 0.0
  %279 = vmatpush.msra.mxu0 0.0
  %280 = vmatpush.msra.mxu0 0.0
  %281 = vmatpush.msra.mxu0 0.0
  %282 = vmatpush.msra.mxu0 0.0
  %283 = vmatpush.msra.mxu0 0.0
  %284 = vmatpush.msra.mxu0 %v261
  %285 = vmatpush.msra.mxu0 %v259
  %286 = vmatmul.f32.gmra.mxu0 %v265
  %v287 = vpop.f32.mrf.mxu0
  %v288 = vadd.f32 0.0, %v287
  %289 = vmatmul.f32.gmra.mxu0 %v268
  %v290 = vpop.f32.mrf.mxu0
  %v291 = vadd.f32 0.0, %v290
  %292 = vdwg.mxu0
  %293 = vrot.lane.b32.xlu0 %v196, 120
  %v294 = vpop.permute.xlu0 %293
  %295 = vrot.lane.b32.xlu0 %v199, 120
  %v296 = vpop.permute.xlu0 %295
  %297 = vrot.lane.b32.xlu0 %v196, 88
  %v298 = vpop.permute.xlu0 %297
  %299 = vrot.lane.b32.xlu0 %v199, 88
  %v300 = vpop.permute.xlu0 %299
  %v301 = vsel %vm207, %v294, 0
  %v303 = vsel %vm207, %v296, 0
  %v305 = vsel %vm207, %v298, 0
  %v307 = vsel %vm207, %v300, 0
  %309 = vmatpush.xpose.msra.mxu0 0.0
  %310 = vmatpush.xpose.msra.mxu0 0.0
  %311 = vmatpush.xpose.msra.mxu0 0.0
  %312 = vmatpush.xpose.msra.mxu0 0.0
  %313 = vmatpush.xpose.msra.mxu0 0.0
  %314 = vmatpush.xpose.msra.mxu0 0.0
  %315 = vmatpush.xpose.msra.mxu0 0.0
  %316 = vmatpush.xpose.msra.mxu0 0.0
  %317 = vmatpush.xpose.msra.mxu0 0.0
  %318 = vmatpush.xpose.msra.mxu0 0.0
  %319 = vmatpush.xpose.msra.mxu0 0.0
  %320 = vmatpush.xpose.msra.mxu0 0.0
  %321 = vmatpush.xpose.msra.mxu0 0.0
  %322 = vmatpush.xpose.msra.mxu0 0.0
  %323 = vmatpush.xpose.msra.mxu0 %v307
  %324 = vmatpush.xpose.msra.mxu0 %v305
  %325 = vmatmul.f32.gmra.mxu0 %v301
  %v326 = vpop.f32.mrf.mxu0
  %v327 = vadd.f32 0.0, %v326
  %328 = vmatmul.f32.gmra.mxu0 %v303
  %v329 = vpop.f32.mrf.mxu0
  %v330 = vadd.f32 0.0, %v329
  %331 = vdwg.mxu0
  %v332 = vmul.f32 %v327, 0.35355338
  %v333 = vmul.f32 %v330, 0.35355338
  %v334 = vadd.f32 %v332, %v152
  %v335 = vadd.f32 %v333, %v153
  %v336 = vmul.f32 %v334, 1.442695
  %v337 = vpow.pop %v336
  %v338 = vmul.f32 %v335, 1.442695
  %v339 = vpow.pop %v338
  %v340 = vsel %vm247, %v337, 0.0
  %341 = vadd.xlane.f32.xlu0 %v340
  %v342 = vpop.xlane.xlu0 %341
  %v343 = vsel %vm247, %v339, 0.0
  %344 = vadd.xlane.f32.xlu0 %v343
  %v345 = vpop.xlane.xlu0 %344
  %v346 = vrcp.pop %v342
  %v347 = vrcp.pop %v345
  %v348 = vmul.f32 %v337, %v346
  %v349 = vmul.f32 %v339, %v347
  %350 = vrot.lane.b32.xlu0 %v196, 56
  %v351 = vpop.permute.xlu0 %350
  %352 = vrot.lane.b32.xlu0 %v199, 56
  %v353 = vpop.permute.xlu0 %352
  %v357 = vsel %vm247, %v348, 0
  %v360 = vsel %vm247, %v349, 0
  %362 = vmatpush.msra.mxu0 0.0
  %363 = vmatpush.msra.mxu0 0.0
  %364 = vmatpush.msra.mxu0 0.0
  %365 = vmatpush.msra.mxu0 0.0
  %366 = vmatpush.msra.mxu0 0.0
  %367 = vmatpush.msra.mxu0 0.0
  %368 = vmatpush.msra.mxu0 0.0
  %369 = vmatpush.msra.mxu0 0.0
  %370 = vmatpush.msra.mxu0 0.0
  %371 = vmatpush.msra.mxu0 0.0
  %372 = vmatpush.msra.mxu0 0.0
  %373 = vmatpush.msra.mxu0 0.0
  %374 = vmatpush.msra.mxu0 0.0
  %375 = vmatpush.msra.mxu0 0.0
  %376 = vmatpush.msra.mxu0 %v353
  %377 = vmatpush.msra.mxu0 %v351
  %378 = vmatmul.f32.gmra.mxu0 %v357
  %v379 = vpop.f32.mrf.mxu0
  %v380 = vadd.f32 0.0, %v379
  %381 = vmatmul.f32.gmra.mxu0 %v360
  %v382 = vpop.f32.mrf.mxu0
  %v383 = vadd.f32 0.0, %v382
  %384 = vdwg.mxu0
  %385 = vrot.lane.b32.xlu0 %v196, 112
  %v386 = vpop.permute.xlu0 %385
  %387 = vrot.lane.b32.xlu0 %v199, 112
  %v388 = vpop.permute.xlu0 %387
  %389 = vrot.lane.b32.xlu0 %v196, 80
  %v390 = vpop.permute.xlu0 %389
  %391 = vrot.lane.b32.xlu0 %v199, 80
  %v392 = vpop.permute.xlu0 %391
  %v393 = vsel %vm207, %v386, 0
  %v395 = vsel %vm207, %v388, 0
  %v397 = vsel %vm207, %v390, 0
  %v399 = vsel %vm207, %v392, 0
  %401 = vmatpush.xpose.msra.mxu0 0.0
  %402 = vmatpush.xpose.msra.mxu0 0.0
  %403 = vmatpush.xpose.msra.mxu0 0.0
  %404 = vmatpush.xpose.msra.mxu0 0.0
  %405 = vmatpush.xpose.msra.mxu0 0.0
  %406 = vmatpush.xpose.msra.mxu0 0.0
  %407 = vmatpush.xpose.msra.mxu0 0.0
  %408 = vmatpush.xpose.msra.mxu0 0.0
  %409 = vmatpush.xpose.msra.mxu0 0.0
  %410 = vmatpush.xpose.msra.mxu0 0.0
  %411 = vmatpush.xpose.msra.mxu0 0.0
  %412 = vmatpush.xpose.msra.mxu0 0.0
  %413 = vmatpush.xpose.msra.mxu0 0.0
  %414 = vmatpush.xpose.msra.mxu0 0.0
  %415 = vmatpush.xpose.msra.mxu0 %v399
  %416 = vmatpush.xpose.msra.mxu0 %v397
  %417 = vmatmul.f32.gmra.mxu0 %v393
  %v418 = vpop.f32.mrf.mxu0
  %v419 = vadd.f32 0.0, %v418
  %420 = vmatmul.f32.gmra.mxu0 %v395
  %v421 = vpop.f32.mrf.mxu0
  %v422 = vadd.f32 0.0, %v421
  %423 = vdwg.mxu0
  %v424 = vmul.f32 %v419, 0.35355338
  %v425 = vmul.f32 %v422, 0.35355338
  %v426 = vadd.f32 %v424, %v152
  %v427 = vadd.f32 %v425, %v153
  %v428 = vmul.f32 %v426, 1.442695
  %v429 = vpow.pop %v428
  %v430 = vmul.f32 %v427, 1.442695
  %v431 = vpow.pop %v430
  %v432 = vsel %vm247, %v429, 0.0
  %433 = vadd.xlane.f32.xlu0 %v432
  %v434 = vpop.xlane.xlu0 %433
  %v435 = vsel %vm247, %v431, 0.0
  %436 = vadd.xlane.f32.xlu0 %v435
  %v437 = vpop.xlane.xlu0 %436
  %v438 = vrcp.pop %v434
  %v439 = vrcp.pop %v437
  %v440 = vmul.f32 %v429, %v438
  %v441 = vmul.f32 %v431, %v439
  %442 = vrot.lane.b32.xlu0 %v196, 48
  %v443 = vpop.permute.xlu0 %442
  %444 = vrot.lane.b32.xlu0 %v199, 48
  %v445 = vpop.permute.xlu0 %444
  %v449 = vsel %vm247, %v440, 0
  %v452 = vsel %vm247, %v441, 0
  %454 = vmatpush.msra.mxu0 0.0
  %455 = vmatpush.msra.mxu0 0.0
  %456 = vmatpush.msra.mxu0 0.0
  %457 = vmatpush.msra.mxu0 0.0
  %458 = vmatpush.msra.mxu0 0.0
  %459 = vmatpush.msra.mxu0 0.0
  %460 = vmatpush.msra.mxu0 0.0
  %461 = vmatpush.msra.mxu0 0.0
  %462 = vmatpush.msra.mxu0 0.0
  %463 = vmatpush.msra.mxu0 0.0
  %464 = vmatpush.msra.mxu0 0.0
  %465 = vmatpush.msra.mxu0 0.0
  %466 = vmatpush.msra.mxu0 0.0
  %467 = vmatpush.msra.mxu0 0.0
  %468 = vmatpush.msra.mxu0 %v445
  %469 = vmatpush.msra.mxu0 %v443
  %470 = vmatmul.f32.gmra.mxu0 %v449
  %v471 = vpop.f32.mrf.mxu0
  %v472 = vadd.f32 0.0, %v471
  %473 = vmatmul.f32.gmra.mxu0 %v452
  %v474 = vpop.f32.mrf.mxu0
  %v475 = vadd.f32 0.0, %v474
  %476 = vdwg.mxu0
  %477 = vrot.lane.b32.xlu0 %v196, 104
  %v478 = vpop.permute.xlu0 %477
  %479 = vrot.lane.b32.xlu0 %v199, 104
  %v480 = vpop.permute.xlu0 %479
  %481 = vrot.lane.b32.xlu0 %v196, 72
  %v482 = vpop.permute.xlu0 %481
  %483 = vrot.lane.b32.xlu0 %v199, 72
  %v484 = vpop.permute.xlu0 %483
  %v485 = vsel %vm207, %v478, 0
  %v487 = vsel %vm207, %v480, 0
  %v489 = vsel %vm207, %v482, 0
  %v491 = vsel %vm207, %v484, 0
  %493 = vmatpush.xpose.msra.mxu0 0.0
  %494 = vmatpush.xpose.msra.mxu0 0.0
  %495 = vmatpush.xpose.msra.mxu0 0.0
  %496 = vmatpush.xpose.msra.mxu0 0.0
  %497 = vmatpush.xpose.msra.mxu0 0.0
  %498 = vmatpush.xpose.msra.mxu0 0.0
  %499 = vmatpush.xpose.msra.mxu0 0.0
  %500 = vmatpush.xpose.msra.mxu0 0.0
  %501 = vmatpush.xpose.msra.mxu0 0.0
  %502 = vmatpush.xpose.msra.mxu0 0.0
  %503 = vmatpush.xpose.msra.mxu0 0.0
  %504 = vmatpush.xpose.msra.mxu0 0.0
  %505 = vmatpush.xpose.msra.mxu0 0.0
  %506 = vmatpush.xpose.msra.mxu0 0.0
  %507 = vmatpush.xpose.msra.mxu0 %v491
  %508 = vmatpush.xpose.msra.mxu0 %v489
  %509 = vmatmul.f32.gmra.mxu0 %v485
  %v510 = vpop.f32.mrf.mxu0
  %v511 = vadd.f32 0.0, %v510
  %512 = vmatmul.f32.gmra.mxu0 %v487
  %v513 = vpop.f32.mrf.mxu0
  %v514 = vadd.f32 0.0, %v513
  %515 = vdwg.mxu0
  %v516 = vmul.f32 %v511, 0.35355338
  %v517 = vmul.f32 %v514, 0.35355338
  %v518 = vadd.f32 %v516, %v152
  %v519 = vadd.f32 %v517, %v153
  %v520 = vmul.f32 %v518, 1.442695
  %v521 = vpow.pop %v520
  %v522 = vmul.f32 %v519, 1.442695
  %v523 = vpow.pop %v522
  %v524 = vsel %vm247, %v521, 0.0
  %525 = vadd.xlane.f32.xlu0 %v524
  %v526 = vpop.xlane.xlu0 %525
  %v527 = vsel %vm247, %v523, 0.0
  %528 = vadd.xlane.f32.xlu0 %v527
  %v529 = vpop.xlane.xlu0 %528
  %v530 = vrcp.pop %v526
  %v531 = vrcp.pop %v529
  %v532 = vmul.f32 %v521, %v530
  %v533 = vmul.f32 %v523, %v531
  %534 = vrot.lane.b32.xlu0 %v196, 40
  %v535 = vpop.permute.xlu0 %534
  %536 = vrot.lane.b32.xlu0 %v199, 40
  %v537 = vpop.permute.xlu0 %536
  %v541 = vsel %vm247, %v532, 0
  %v544 = vsel %vm247, %v533, 0
  %546 = vmatpush.msra.mxu0 0.0
  %547 = vmatpush.msra.mxu0 0.0
  %548 = vmatpush.msra.mxu0 0.0
  %549 = vmatpush.msra.mxu0 0.0
  %550 = vmatpush.msra.mxu0 0.0
  %551 = vmatpush.msra.mxu0 0.0
  %552 = vmatpush.msra.mxu0 0.0
  %553 = vmatpush.msra.mxu0 0.0
  %554 = vmatpush.msra.mxu0 0.0
  %555 = vmatpush.msra.mxu0 0.0
  %556 = vmatpush.msra.mxu0 0.0
  %557 = vmatpush.msra.mxu0 0.0
  %558 = vmatpush.msra.mxu0 0.0
  %559 = vmatpush.msra.mxu0 0.0
  %560 = vmatpush.msra.mxu0 %v537
  %561 = vmatpush.msra.mxu0 %v535
  %562 = vmatmul.f32.gmra.mxu0 %v541
  %v563 = vpop.f32.mrf.mxu0
  %v564 = vadd.f32 0.0, %v563
  %565 = vmatmul.f32.gmra.mxu0 %v544
  %v566 = vpop.f32.mrf.mxu0
  %v567 = vadd.f32 0.0, %v566
  %568 = vdwg.mxu0
  %571 = vrot.lane.b32.xlu0 %v380, 8
  %v572 = vpop.permute.xlu0 %571
  %573 = vrot.lane.b32.xlu0 %v383, 8
  %v574 = vpop.permute.xlu0 %573
  %579 = vrot.lane.b32.xlu0 %v472, 16
  %v580 = vpop.permute.xlu0 %579
  %581 = vrot.lane.b32.xlu0 %v475, 16
  %v582 = vpop.permute.xlu0 %581
  %587 = vrot.lane.b32.xlu0 %v564, 24
  %v588 = vpop.permute.xlu0 %587
  %589 = vrot.lane.b32.xlu0 %v567, 24
  %v590 = vpop.permute.xlu0 %589
  %v593 = vsel %vm207, %v288, %v572
  %v594 = vsel %vm207, %v291, %v574
  %v595 = vsel %vm247, %v593, %v580
  %v596 = vsel %vm247, %v594, %v582
  %vm597 = vcmask 195584
  %v598 = vsel %vm597, %v595, %v588
  %v599 = vsel %vm597, %v596, %v590
  %v600 = vperm.slane %v170, 1
  %605 = vrot.lane.b32.xlu0 %v154, 32
  %v606 = vpop.permute.xlu0 %605
  %607 = vrot.lane.b32.xlu0 %v155, 32
  %v608 = vpop.permute.xlu0 %607
  %609 = vrot.lane.b32.xlu0 %v156, 32
  %v610 = vpop.permute.xlu0 %609
  %611 = vrot.lane.b32.xlu0 %v157, 32
  %v612 = vpop.permute.xlu0 %611
  %v618 = vsel %vm94, %v598, 0
  %v621 = vsel %vm94, %v599, 0
  %623 = vmatpush.msra.mxu0 0.0
  %624 = vmatpush.msra.mxu0 0.0
  %625 = vmatpush.msra.mxu0 0.0
  %626 = vmatpush.msra.mxu0 0.0
  %627 = vmatpush.msra.mxu0 0.0
  %628 = vmatpush.msra.mxu0 0.0
  %629 = vmatpush.msra.mxu0 0.0
  %630 = vmatpush.msra.mxu0 0.0
  %631 = vmatpush.msra.mxu0 0.0
  %632 = vmatpush.msra.mxu0 0.0
  %633 = vmatpush.msra.mxu0 0.0
  %634 = vmatpush.msra.mxu0 0.0
  %635 = vmatpush.msra.mxu0 %v612
  %636 = vmatpush.msra.mxu0 %v610
  %637 = vmatpush.msra.mxu0 %v608
  %638 = vmatpush.msra.mxu0 %v606
  %639 = vmatmul.f32.gmra.mxu0 %v618
  %v640 = vpop.f32.mrf.mxu0
  %v641 = vadd.f32 %v600, %v640
  %642 = vmatmul.f32.gmra.mxu0 %v621
  %v643 = vpop.f32.mrf.mxu0
  %v644 = vadd.f32 %v600, %v643
  %645 = vdwg.mxu0
  %v646 = vadd.f32 %v150, %v641
  %v647 = vadd.f32 %v151, %v644
  %v648 = vsel %vm94, %v646, 0.0
  %649 = vadd.xlane.f32.xlu0 %v648
  %v650 = vpop.xlane.xlu0 %649
  %v651 = vsel %vm94, %v647, 0.0
  %652 = vadd.xlane.f32.xlu0 %v651
  %v653 = vpop.xlane.xlu0 %652
  %v654 = vmul.f32 %v650, %v107
  %v655 = vmul.f32 %v653, %v107
  %v656 = vsub.f32 %v646, %v654
  %v657 = vsub.f32 %v647, %v655
  %v658 = vmul.f32 %v656, %v656
  %v659 = vmul.f32 %v657, %v657
  %v660 = vsel %vm94, %v658, 0.0
  %661 = vadd.xlane.f32.xlu0 %v660
  %v662 = vpop.xlane.xlu0 %661
  %v663 = vsel %vm94, %v659, 0.0
  %664 = vadd.xlane.f32.xlu0 %v663
  %v665 = vpop.xlane.xlu0 %664
  %v666 = vmul.f32 %v662, %v107
  %v667 = vmul.f32 %v665, %v107
  %v668 = vadd.f32 %v666, 1e-12
  %v669 = vadd.f32 %v667, 1e-12
  %v670 = vrsqrt.pop %v668
  %v671 = vmul.f32 %v670, %v668
  %v672 = vmul.f32 %v671, %v670
  %v673 = vmul.f32 0.5, %v672
  %v674 = vsub.f32 1.5, %v673
  %v675 = vmul.f32 %v670, %v674
  %vm676 = vweird.f32 %v668
  %vm677 = vweird.f32 %v670
  %vm678 = vmor %vm676, %vm677
  %v679 = vsel %vm678, %v670, %v675
  %v680 = vrsqrt.pop %v669
  %v681 = vmul.f32 %v680, %v669
  %v682 = vmul.f32 %v681, %v680
  %v683 = vmul.f32 0.5, %v682
  %v684 = vsub.f32 1.5, %v683
  %v685 = vmul.f32 %v680, %v684
  %vm686 = vweird.f32 %v669
  %vm687 = vweird.f32 %v680
  %vm688 = vmor %vm686, %vm687
  %v689 = vsel %vm688, %v680, %v685
  %v690 = vmul.f32 %v656, %v679
  %v691 = vmul.f32 %v657, %v689
  %693 = vrot.lane.b32.xlu0 %v600, 96
  %v694 = vpop.permute.xlu0 %693
  %v696 = vmul.f32 %v690, %v694
  %v697 = vmul.f32 %v691, %v694
  %698 = vrot.lane.b32.xlu0 %v600, 64
  %v699 = vpop.permute.xlu0 %698
  %v701 = vadd.f32 %v696, %v699
  %v702 = vadd.f32 %v697, %v699
  %v703 = vperm.slane %v170, 2
  %v705 = vsel %vm94, %v701, 0
  %v708 = vsel %vm94, %v702, 0
  %710 = vmatpush.msra.mxu0 0.0
  %711 = vmatpush.msra.mxu0 0.0
  %712 = vmatpush.msra.mxu0 0.0
  %713 = vmatpush.msra.mxu0 0.0
  %714 = vmatpush.msra.mxu0 0.0
  %715 = vmatpush.msra.mxu0 0.0
  %716 = vmatpush.msra.mxu0 0.0
  %717 = vmatpush.msra.mxu0 0.0
  %718 = vmatpush.msra.mxu0 0.0
  %719 = vmatpush.msra.mxu0 0.0
  %720 = vmatpush.msra.mxu0 0.0
  %721 = vmatpush.msra.mxu0 0.0
  %722 = vmatpush.msra.mxu0 %v161
  %723 = vmatpush.msra.mxu0 %v160
  %724 = vmatpush.msra.mxu0 %v159
  %725 = vmatpush.msra.mxu0 %v158
  %726 = vmatmul.f32.gmra.mxu0 %v705
  %v727 = vpop.f32.mrf.mxu0
  %v728 = vadd.f32 %v703, %v727
  %729 = vmatmul.f32.gmra.mxu0 %v708
  %v730 = vpop.f32.mrf.mxu0
  %v731 = vadd.f32 %v703, %v730
  %732 = vdwg.mxu0
  %v733 = vmul.f32 %v728, %v728
  %v734 = vmul.f32 %v731, %v731
  %v735 = vmul.f32 %v728, %v733
  %v736 = vmul.f32 %v731, %v734
  %v737 = vmul.f32 %v735, 0.044715
  %v738 = vmul.f32 %v736, 0.044715
  %v739 = vadd.f32 %v728, %v737
  %v740 = vadd.f32 %v731, %v738
  %v741 = vmul.f32 %v739, 0.7978846
  %v742 = vmul.f32 %v740, 0.7978846
  %v743 = vtanh.pop %v741
  %v744 = vtanh.pop %v742
  %v745 = vadd.f32 %v743, 1.0
  %v746 = vadd.f32 %v744, 1.0
  %v747 = vmul.f32 %v745, 0.5
  %v748 = vmul.f32 %v746, 0.5
  %v749 = vmul.f32 %v728, %v747
  %v750 = vmul.f32 %v731, %v748
  %v751 = vperm.slane %v170, 3
  %vm752 = vcmask 523264
  %v754 = vsel %vm752, %v749, 0
  %v757 = vsel %vm752, %v750, 0
  %759 = vmatpush.msra.mxu0 0.0
  %760 = vmatpush.msra.mxu0 0.0
  %761 = vmatpush.msra.mxu0 0.0
  %762 = vmatpush.msra.mxu0 0.0
  %763 = vmatpush.msra.mxu0 0.0
  %764 = vmatpush.msra.mxu0 0.0
  %765 = vmatpush.msra.mxu0 0.0
  %766 = vmatpush.msra.mxu0 0.0
  %767 = vmatpush.msra.mxu0 %v169
  %768 = vmatpush.msra.mxu0 %v168
  %769 = vmatpush.msra.mxu0 %v167
  %770 = vmatpush.msra.mxu0 %v166
  %771 = vmatpush.msra.mxu0 %v165
  %772 = vmatpush.msra.mxu0 %v164
  %773 = vmatpush.msra.mxu0 %v163
  %774 = vmatpush.msra.mxu0 %v162
  %775 = vmatmul.f32.gmra.mxu0 %v754
  %v776 = vpop.f32.mrf.mxu0
  %v777 = vadd.f32 %v751, %v776
  %778 = vmatmul.f32.gmra.mxu0 %v757
  %v779 = vpop.f32.mrf.mxu0
  %v780 = vadd.f32 %v751, %v779
  %781 = vdwg.mxu0
  %v782 = vadd.f32 %v701, %v777
  %v783 = vadd.f32 %v702, %v780
  %v784 = vsel %vm94, %v782, 0.0
  %785 = vadd.xlane.f32.xlu0 %v784
  %v786 = vpop.xlane.xlu0 %785
  %v787 = vsel %vm94, %v783, 0.0
  %788 = vadd.xlane.f32.xlu0 %v787
  %v789 = vpop.xlane.xlu0 %788
  %v790 = vmul.f32 %v786, %v107
  %v791 = vmul.f32 %v789, %v107
  %v792 = vsub.f32 %v782, %v790
  %v793 = vsub.f32 %v783, %v791
  %v794 = vmul.f32 %v792, %v792
  %v795 = vmul.f32 %v793, %v793
  %v796 = vsel %vm94, %v794, 0.0
  %797 = vadd.xlane.f32.xlu0 %v796
  %v798 = vpop.xlane.xlu0 %797
  %v799 = vsel %vm94, %v795, 0.0
  %800 = vadd.xlane.f32.xlu0 %v799
  %v801 = vpop.xlane.xlu0 %800
  %v802 = vmul.f32 %v798, %v107
  %v803 = vmul.f32 %v801, %v107
  %v804 = vadd.f32 %v802, 1e-12
  %v805 = vadd.f32 %v803, 1e-12
  %v806 = vrsqrt.pop %v804
  %v807 = vmul.f32 %v806, %v804
  %v808 = vmul.f32 %v807, %v806
  %v809 = vmul.f32 0.5, %v808
  %v810 = vsub.f32 1.5, %v809
  %v811 = vmul.f32 %v806, %v810
  %vm812 = vweird.f32 %v804
  %vm813 = vweird.f32 %v806
  %vm814 = vmor %vm812, %vm813
  %v815 = vsel %vm814, %v806, %v811
  %v816 = vrsqrt.pop %v805
  %v817 = vmul.f32 %v816, %v805
  %v818 = vmul.f32 %v817, %v816
  %v819 = vmul.f32 0.5, %v818
  %v820 = vsub.f32 1.5, %v819
  %v821 = vmul.f32 %v816, %v820
  %vm822 = vweird.f32 %v805
  %vm823 = vweird.f32 %v816
  %vm824 = vmor %vm822, %vm823
  %v825 = vsel %vm824, %v816, %v821
  %v826 = vmul.f32 %v792, %v815
  %v827 = vmul.f32 %v793, %v825
  %829 = vrot.lane.b32.xlu0 %v751, 96
  %v830 = vpop.permute.xlu0 %829
  %v832 = vmul.f32 %v826, %v830
  %v833 = vmul.f32 %v827, %v830
  %834 = vrot.lane.b32.xlu0 %v751, 64
  %v835 = vpop.permute.xlu0 %834
  %v837 = vadd.f32 %v832, %v835
  %v838 = vadd.f32 %v833, %v835
  %s839 = scalar_lea.vmem %s5, 32
  %v840 = vld [vmem:[%s839] sm:$0xff]
  %v841 = vld [vmem:[%s839 + $0x8] sm:$0xff]
  %v842 = vld [vmem:[%s839 + $0x10] sm:$0xff]
  %v843 = vld [vmem:[%s839 + $0x18] sm:$0xff]
  %s844 = scalar_lea.vmem %s6, 96
  %v845 = vld [vmem:[%s844] sm:$0xff]
  %v846 = vld [vmem:[%s844 + $0x8] sm:$0xff]
  %v847 = vld [vmem:[%s844 + $0x10] sm:$0xff]
  %v848 = vld [vmem:[%s844 + $0x18] sm:$0xff]
  %v849 = vld [vmem:[%s844 + $0x20] sm:$0xff]
  %v850 = vld [vmem:[%s844 + $0x28] sm:$0xff]
  %v851 = vld [vmem:[%s844 + $0x30] sm:$0xff]
  %v852 = vld [vmem:[%s844 + $0x38] sm:$0xff]
  %v853 = vld [vmem:[%s844 + $0x40] sm:$0xff]
  %v854 = vld [vmem:[%s844 + $0x48] sm:$0xff]
  %v855 = vld [vmem:[%s844 + $0x50] sm:$0xff]
  %v856 = vld [vmem:[%s844 + $0x58] sm:$0xff]
  %s857 = scalar_lea.vmem %s7, 4
  %v858 = vld [vmem:[%s857] sm:$0xf]
  %v859 = vperm.slane %v858, 0
  %v861 = vsel %vm94, %v837, 0
  %v864 = vsel %vm94, %v838, 0
  %866 = vmatpush.msra.mxu0 0.0
  %867 = vmatpush.msra.mxu0 0.0
  %868 = vmatpush.msra.mxu0 0.0
  %869 = vmatpush.msra.mxu0 0.0
  %870 = vmatpush.msra.mxu0 0.0
  %871 = vmatpush.msra.mxu0 0.0
  %872 = vmatpush.msra.mxu0 0.0
  %873 = vmatpush.msra.mxu0 0.0
  %874 = vmatpush.msra.mxu0 0.0
  %875 = vmatpush.msra.mxu0 0.0
  %876 = vmatpush.msra.mxu0 0.0
  %877 = vmatpush.msra.mxu0 0.0
  %878 = vmatpush.msra.mxu0 %v843
  %879 = vmatpush.msra.mxu0 %v842
  %880 = vmatpush.msra.mxu0 %v841
  %881 = vmatpush.msra.mxu0 %v840
  %882 = vmatmul.f32.gmra.mxu0 %v861
  %v883 = vpop.f32.mrf.mxu0
  %v884 = vadd.f32 %v859, %v883
  %885 = vmatmul.f32.gmra.mxu0 %v864
  %v886 = vpop.f32.mrf.mxu0
  %v887 = vadd.f32 %v859, %v886
  %888 = vdwg.mxu0
  %891 = vrot.lane.b32.xlu0 %v884, 96
  %v892 = vpop.permute.xlu0 %891
  %893 = vrot.lane.b32.xlu0 %v887, 96
  %v894 = vpop.permute.xlu0 %893
  %v895 = vsel %vm207, %v884, 0
  %v897 = vsel %vm207, %v887, 0
  %v899 = vsel %vm207, %v892, 0
  %v901 = vsel %vm207, %v894, 0
  %903 = vmatpush.xpose.msra.mxu0 0.0
  %904 = vmatpush.xpose.msra.mxu0 0.0
  %905 = vmatpush.xpose.msra.mxu0 0.0
  %906 = vmatpush.xpose.msra.mxu0 0.0
  %907 = vmatpush.xpose.msra.mxu0 0.0
  %908 = vmatpush.xpose.msra.mxu0 0.0
  %909 = vmatpush.xpose.msra.mxu0 0.0
  %910 = vmatpush.xpose.msra.mxu0 0.0
  %911 = vmatpush.xpose.msra.mxu0 0.0
  %912 = vmatpush.xpose.msra.mxu0 0.0
  %913 = vmatpush.xpose.msra.mxu0 0.0
  %914 = vmatpush.xpose.msra.mxu0 0.0
  %915 = vmatpush.xpose.msra.mxu0 0.0
  %916 = vmatpush.xpose.msra.mxu0 0.0
  %917 = vmatpush.xpose.msra.mxu0 %v901
  %918 = vmatpush.xpose.msra.mxu0 %v899
  %919 = vmatmul.f32.gmra.mxu0 %v895
  %v920 = vpop.f32.mrf.mxu0
  %v921 = vadd.f32 0.0, %v920
  %922 = vmatmul.f32.gmra.mxu0 %v897
  %v923 = vpop.f32.mrf.mxu0
  %v924 = vadd.f32 0.0, %v923
  %925 = vdwg.mxu0
  %v926 = vmul.f32 %v921, 0.35355338
  %v927 = vmul.f32 %v924, 0.35355338
  %v928 = vadd.f32 %v926, %v152
  %v929 = vadd.f32 %v927, %v153
  %v930 = vmul.f32 %v928, 1.442695
  %v931 = vpow.pop %v930
  %v932 = vmul.f32 %v929, 1.442695
  %v933 = vpow.pop %v932
  %v934 = vsel %vm247, %v931, 0.0
  %935 = vadd.xlane.f32.xlu0 %v934
  %v936 = vpop.xlane.xlu0 %935
  %v937 = vsel %vm247, %v933, 0.0
  %938 = vadd.xlane.f32.xlu0 %v937
  %v939 = vpop.xlane.xlu0 %938
  %v940 = vrcp.pop %v936
  %v941 = vrcp.pop %v939
  %v942 = vmul.f32 %v931, %v940
  %v943 = vmul.f32 %v933, %v941
  %944 = vrot.lane.b32.xlu0 %v884, 64
  %v945 = vpop.permute.xlu0 %944
  %946 = vrot.lane.b32.xlu0 %v887, 64
  %v947 = vpop.permute.xlu0 %946
  %v951 = vsel %vm247, %v942, 0
  %v954 = vsel %vm247, %v943, 0
  %956 = vmatpush.msra.mxu0 0.0
  %957 = vmatpush.msra.mxu0 0.0
  %958 = vmatpush.msra.mxu0 0.0
  %959 = vmatpush.msra.mxu0 0.0
  %960 = vmatpush.msra.mxu0 0.0
  %961 = vmatpush.msra.mxu0 0.0
  %962 = vmatpush.msra.mxu0 0.0
  %963 = vmatpush.msra.mxu0 0.0
  %964 = vmatpush.msra.mxu0 0.0
  %965 = vmatpush.msra.mxu0 0.0
  %966 = vmatpush.msra.mxu0 0.0
  %967 = vmatpush.msra.mxu0 0.0
  %968 = vmatpush.msra.mxu0 0.0
  %969 = vmatpush.msra.mxu0 0.0
  %970 = vmatpush.msra.mxu0 %v947
  %971 = vmatpush.msra.mxu0 %v945
  %972 = vmatmul.f32.gmra.mxu0 %v951
  %v973 = vpop.f32.mrf.mxu0
  %v974 = vadd.f32 0.0, %v973
  %975 = vmatmul.f32.gmra.mxu0 %v954
  %v976 = vpop.f32.mrf.mxu0
  %v977 = vadd.f32 0.0, %v976
  %978 = vdwg.mxu0
  %979 = vrot.lane.b32.xlu0 %v884, 120
  %v980 = vpop.permute.xlu0 %979
  %981 = vrot.lane.b32.xlu0 %v887, 120
  %v982 = vpop.permute.xlu0 %981
  %983 = vrot.lane.b32.xlu0 %v884, 88
  %v984 = vpop.permute.xlu0 %983
  %985 = vrot.lane.b32.xlu0 %v887, 88
  %v986 = vpop.permute.xlu0 %985
  %v987 = vsel %vm207, %v980, 0
  %v989 = vsel %vm207, %v982, 0
  %v991 = vsel %vm207, %v984, 0
  %v993 = vsel %vm207, %v986, 0
  %995 = vmatpush.xpose.msra.mxu0 0.0
  %996 = vmatpush.xpose.msra.mxu0 0.0
  %997 = vmatpush.xpose.msra.mxu0 0.0
  %998 = vmatpush.xpose.msra.mxu0 0.0
  %999 = vmatpush.xpose.msra.mxu0 0.0
  %1000 = vmatpush.xpose.msra.mxu0 0.0
  %1001 = vmatpush.xpose.msra.mxu0 0.0
  %1002 = vmatpush.xpose.msra.mxu0 0.0
  %1003 = vmatpush.xpose.msra.mxu0 0.0
  %1004 = vmatpush.xpose.msra.mxu0 0.0
  %1005 = vmatpush.xpose.msra.mxu0 0.0
  %1006 = vmatpush.xpose.msra.mxu0 0.0
  %1007 = vmatpush.xpose.msra.mxu0 0.0
  %1008 = vmatpush.xpose.msra.mxu0 0.0
  %1009 = vmatpush.xpose.msra.mxu0 %v993
  %1010 = vmatpush.xpose.msra.mxu0 %v991
  %1011 = vmatmul.f32.gmra.mxu0 %v987
  %v1012 = vpop.f32.mrf.mxu0
  %v1013 = vadd.f32 0.0, %v1012
  %1014 = vmatmul.f32.gmra.mxu0 %v989
  %v1015 = vpop.f32.mrf.mxu0
  %v1016 = vadd.f32 0.0, %v1015
  %1017 = vdwg.mxu0
  %v1018 = vmul.f32 %v1013, 0.35355338
  %v1019 = vmul.f32 %v1016, 0.35355338
  %v1020 = vadd.f32 %v1018, %v152
  %v1021 = vadd.f32 %v1019, %v153
  %v1022 = vmul.f32 %v1020, 1.442695
  %v1023 = vpow.pop %v1022
  %v1024 = vmul.f32 %v1021, 1.442695
  %v1025 = vpow.pop %v1024
  %v1026 = vsel %vm247, %v1023, 0.0
  %1027 = vadd.xlane.f32.xlu0 %v1026
  %v1028 = vpop.xlane.xlu0 %1027
  %v1029 = vsel %vm247, %v1025, 0.0
  %1030 = vadd.xlane.f32.xlu0 %v1029
  %v1031 = vpop.xlane.xlu0 %1030
  %v1032 = vrcp.pop %v1028
  %v1033 = vrcp.pop %v1031
  %v1034 = vmul.f32 %v1023, %v1032
  %v1035 = vmul.f32 %v1025, %v1033
  %1036 = vrot.lane.b32.xlu0 %v884, 56
  %v1037 = vpop.permute.xlu0 %1036
  %1038 = vrot.lane.b32.xlu0 %v887, 56
  %v1039 = vpop.permute.xlu0 %1038
  %v1043 = vsel %vm247, %v1034, 0
  %v1046 = vsel %vm247, %v1035, 0
  %1048 = vmatpush.msra.mxu0 0.0
  %1049 = vmatpush.msra.mxu0 0.0
  %1050 = vmatpush.msra.mxu0 0.0
  %1051 = vmatpush.msra.mxu0 0.0
  %1052 = vmatpush.msra.mxu0 0.0
  %1053 = vmatpush.msra.mxu0 0.0
  %1054 = vmatpush.msra.mxu0 0.0
  %1055 = vmatpush.msra.mxu0 0.0
  %1056 = vmatpush.msra.mxu0 0.0
  %1057 = vmatpush.msra.mxu0 0.0
  %1058 = vmatpush.msra.mxu0 0.0
  %1059 = vmatpush.msra.mxu0 0.0
  %1060 = vmatpush.msra.mxu0 0.0
  %1061 = vmatpush.msra.mxu0 0.0
  %1062 = vmatpush.msra.mxu0 %v1039
  %1063 = vmatpush.msra.mxu0 %v1037
  %1064 = vmatmul.f32.gmra.mxu0 %v1043
  %v1065 = vpop.f32.mrf.mxu0
  %v1066 = vadd.f32 0.0, %v1065
  %1067 = vmatmul.f32.gmra.mxu0 %v1046
  %v1068 = vpop.f32.mrf.mxu0
  %v1069 = vadd.f32 0.0, %v1068
  %1070 = vdwg.mxu0
  %1071 = vrot.lane.b32.xlu0 %v884, 112
  %v1072 = vpop.permute.xlu0 %1071
  %1073 = vrot.lane.b32.xlu0 %v887, 112
  %v1074 = vpop.permute.xlu0 %1073
  %1075 = vrot.lane.b32.xlu0 %v884, 80
  %v1076 = vpop.permute.xlu0 %1075
  %1077 = vrot.lane.b32.xlu0 %v887, 80
  %v1078 = vpop.permute.xlu0 %1077
  %v1079 = vsel %vm207, %v1072, 0
  %v1081 = vsel %vm207, %v1074, 0
  %v1083 = vsel %vm207, %v1076, 0
  %v1085 = vsel %vm207, %v1078, 0
  %1087 = vmatpush.xpose.msra.mxu0 0.0
  %1088 = vmatpush.xpose.msra.mxu0 0.0
  %1089 = vmatpush.xpose.msra.mxu0 0.0
  %1090 = vmatpush.xpose.msra.mxu0 0.0
  %1091 = vmatpush.xpose.msra.mxu0 0.0
  %1092 = vmatpush.xpose.msra.mxu0 0.0
  %1093 = vmatpush.xpose.msra.mxu0 0.0
  %1094 = vmatpush.xpose.msra.mxu0 0.0
  %1095 = vmatpush.xpose.msra.mxu0 0.0
  %1096 = vmatpush.xpose.msra.mxu0 0.0
  %1097 = vmatpush.xpose.msra.mxu0 0.0
  %1098 = vmatpush.xpose.msra.mxu0 0.0
  %1099 = vmatpush.xpose.msra.mxu0 0.0
  %1100 = vmatpush.xpose.msra.mxu0 0.0
  %1101 = vmatpush.xpose.msra.mxu0 %v1085
  %1102 = vmatpush.xpose.msra.mxu0 %v1083
  %1103 = vmatmul.f32.gmra.mxu0 %v1079
  %v1104 = vpop.f32.mrf.mxu0
  %v1105 = vadd.f32 0.0, %v1104
  %1106 = vmatmul.f32.gmra.mxu0 %v1081
  %v1107 = vpop.f32.mrf.mxu0
  %v1108 = vadd.f32 0.0, %v1107
  %1109 = vdwg.mxu0
  %v1110 = vmul.f32 %v1105, 0.35355338
  %v1111 = vmul.f32 %v1108, 0.35355338
  %v1112 = vadd.f32 %v1110, %v152
  %v1113 = vadd.f32 %v1111, %v153
  %v1114 = vmul.f32 %v1112, 1.442695
  %v1115 = vpow.pop %v1114
  %v1116 = vmul.f32 %v1113, 1.442695
  %v1117 = vpow.pop %v1116
  %v1118 = vsel %vm247, %v1115, 0.0
  %1119 = vadd.xlane.f32.xlu0 %v1118
  %v1120 = vpop.xlane.xlu0 %1119
  %v1121 = vsel %vm247, %v1117, 0.0
  %1122 = vadd.xlane.f32.xlu0 %v1121
  %v1123 = vpop.xlane.xlu0 %1122
  %v1124 = vrcp.pop %v1120
  %v1125 = vrcp.pop %v1123
  %v1126 = vmul.f32 %v1115, %v1124
  %v1127 = vmul.f32 %v1117, %v1125
  %1128 = vrot.lane.b32.xlu0 %v884, 48
  %v1129 = vpop.permute.xlu0 %1128
  %1130 = vrot.lane.b32.xlu0 %v887, 48
  %v1131 = vpop.permute.xlu0 %1130
  %v1135 = vsel %vm247, %v1126, 0
  %v1138 = vsel %vm247, %v1127, 0
  %1140 = vmatpush.msra.mxu0 0.0
  %1141 = vmatpush.msra.mxu0 0.0
  %1142 = vmatpush.msra.mxu0 0.0
  %1143 = vmatpush.msra.mxu0 0.0
  %1144 = vmatpush.msra.mxu0 0.0
  %1145 = vmatpush.msra.mxu0 0.0
  %1146 = vmatpush.msra.mxu0 0.0
  %1147 = vmatpush.msra.mxu0 0.0
  %1148 = vmatpush.msra.mxu0 0.0
  %1149 = vmatpush.msra.mxu0 0.0
  %1150 = vmatpush.msra.mxu0 0.0
  %1151 = vmatpush.msra.mxu0 0.0
  %1152 = vmatpush.msra.mxu0 0.0
  %1153 = vmatpush.msra.mxu0 0.0
  %1154 = vmatpush.msra.mxu0 %v1131
  %1155 = vmatpush.msra.mxu0 %v1129
  %1156 = vmatmul.f32.gmra.mxu0 %v1135
  %v1157 = vpop.f32.mrf.mxu0
  %v1158 = vadd.f32 0.0, %v1157
  %1159 = vmatmul.f32.gmra.mxu0 %v1138
  %v1160 = vpop.f32.mrf.mxu0
  %v1161 = vadd.f32 0.0, %v1160
  %1162 = vdwg.mxu0
  %1163 = vrot.lane.b32.xlu0 %v884, 104
  %v1164 = vpop.permute.xlu0 %1163
  %1165 = vrot.lane.b32.xlu0 %v887, 104
  %v1166 = vpop.permute.xlu0 %1165
  %1167 = vrot.lane.b32.xlu0 %v884, 72
  %v1168 = vpop.permute.xlu0 %1167
  %1169 = vrot.lane.b32.xlu0 %v887, 72
  %v1170 = vpop.permute.xlu0 %1169
  %v1171 = vsel %vm207, %v1164, 0
  %v1173 = vsel %vm207, %v1166, 0
  %v1175 = vsel %vm207, %v1168, 0
  %v1177 = vsel %vm207, %v1170, 0
  %1179 = vmatpush.xpose.msra.mxu0 0.0
  %1180 = vmatpush.xpose.msra.mxu0 0.0
  %1181 = vmatpush.xpose.msra.mxu0 0.0
  %1182 = vmatpush.xpose.msra.mxu0 0.0
  %1183 = vmatpush.xpose.msra.mxu0 0.0
  %1184 = vmatpush.xpose.msra.mxu0 0.0
  %1185 = vmatpush.xpose.msra.mxu0 0.0
  %1186 = vmatpush.xpose.msra.mxu0 0.0
  %1187 = vmatpush.xpose.msra.mxu0 0.0
  %1188 = vmatpush.xpose.msra.mxu0 0.0
  %1189 = vmatpush.xpose.msra.mxu0 0.0
  %1190 = vmatpush.xpose.msra.mxu0 0.0
  %1191 = vmatpush.xpose.msra.mxu0 0.0
  %1192 = vmatpush.xpose.msra.mxu0 0.0
  %1193 = vmatpush.xpose.msra.mxu0 %v1177
  %1194 = vmatpush.xpose.msra.mxu0 %v1175
  %1195 = vmatmul.f32.gmra.mxu0 %v1171
  %v1196 = vpop.f32.mrf.mxu0
  %v1197 = vadd.f32 0.0, %v1196
  %1198 = vmatmul.f32.gmra.mxu0 %v1173
  %v1199 = vpop.f32.mrf.mxu0
  %v1200 = vadd.f32 0.0, %v1199
  %1201 = vdwg.mxu0
  %v1202 = vmul.f32 %v1197, 0.35355338
  %v1203 = vmul.f32 %v1200, 0.35355338
  %v1204 = vadd.f32 %v1202, %v152
  %v1205 = vadd.f32 %v1203, %v153
  %v1206 = vmul.f32 %v1204, 1.442695
  %v1207 = vpow.pop %v1206
  %v1208 = vmul.f32 %v1205, 1.442695
  %v1209 = vpow.pop %v1208
  %v1210 = vsel %vm247, %v1207, 0.0
  %1211 = vadd.xlane.f32.xlu0 %v1210
  %v1212 = vpop.xlane.xlu0 %1211
  %v1213 = vsel %vm247, %v1209, 0.0
  %1214 = vadd.xlane.f32.xlu0 %v1213
  %v1215 = vpop.xlane.xlu0 %1214
  %v1216 = vrcp.pop %v1212
  %v1217 = vrcp.pop %v1215
  %v1218 = vmul.f32 %v1207, %v1216
  %v1219 = vmul.f32 %v1209, %v1217
  %1220 = vrot.lane.b32.xlu0 %v884, 40
  %v1221 = vpop.permute.xlu0 %1220
  %1222 = vrot.lane.b32.xlu0 %v887, 40
  %v1223 = vpop.permute.xlu0 %1222
  %v1227 = vsel %vm247, %v1218, 0
  %v1230 = vsel %vm247, %v1219, 0
  %1232 = vmatpush.msra.mxu0 0.0
  %1233 = vmatpush.msra.mxu0 0.0
  %1234 = vmatpush.msra.mxu0 0.0
  %1235 = vmatpush.msra.mxu0 0.0
  %1236 = vmatpush.msra.mxu0 0.0
  %1237 = vmatpush.msra.mxu0 0.0
  %1238 = vmatpush.msra.mxu0 0.0
  %1239 = vmatpush.msra.mxu0 0.0
  %1240 = vmatpush.msra.mxu0 0.0
  %1241 = vmatpush.msra.mxu0 0.0
  %1242 = vmatpush.msra.mxu0 0.0
  %1243 = vmatpush.msra.mxu0 0.0
  %1244 = vmatpush.msra.mxu0 0.0
  %1245 = vmatpush.msra.mxu0 0.0
  %1246 = vmatpush.msra.mxu0 %v1223
  %1247 = vmatpush.msra.mxu0 %v1221
  %1248 = vmatmul.f32.gmra.mxu0 %v1227
  %v1249 = vpop.f32.mrf.mxu0
  %v1250 = vadd.f32 0.0, %v1249
  %1251 = vmatmul.f32.gmra.mxu0 %v1230
  %v1252 = vpop.f32.mrf.mxu0
  %v1253 = vadd.f32 0.0, %v1252
  %1254 = vdwg.mxu0
  %1257 = vrot.lane.b32.xlu0 %v1066, 8
  %v1258 = vpop.permute.xlu0 %1257
  %1259 = vrot.lane.b32.xlu0 %v1069, 8
  %v1260 = vpop.permute.xlu0 %1259
  %1265 = vrot.lane.b32.xlu0 %v1158, 16
  %v1266 = vpop.permute.xlu0 %1265
  %1267 = vrot.lane.b32.xlu0 %v1161, 16
  %v1268 = vpop.permute.xlu0 %1267
  %1273 = vrot.lane.b32.xlu0 %v1250, 24
  %v1274 = vpop.permute.xlu0 %1273
  %1275 = vrot.lane.b32.xlu0 %v1253, 24
  %v1276 = vpop.permute.xlu0 %1275
  %v1279 = vsel %vm207, %v974, %v1258
  %v1280 = vsel %vm207, %v977, %v1260
  %v1281 = vsel %vm247, %v1279, %v1266
  %v1282 = vsel %vm247, %v1280, %v1268
  %v1283 = vsel %vm597, %v1281, %v1274
  %v1284 = vsel %vm597, %v1282, %v1276
  %v1285 = vperm.slane %v858, 1
  %1290 = vrot.lane.b32.xlu0 %v840, 32
  %v1291 = vpop.permute.xlu0 %1290
  %1292 = vrot.lane.b32.xlu0 %v841, 32
  %v1293 = vpop.permute.xlu0 %1292
  %1294 = vrot.lane.b32.xlu0 %v842, 32
  %v1295 = vpop.permute.xlu0 %1294
  %1296 = vrot.lane.b32.xlu0 %v843, 32
  %v1297 = vpop.permute.xlu0 %1296
  %v1303 = vsel %vm94, %v1283, 0
  %v1306 = vsel %vm94, %v1284, 0
  %1308 = vmatpush.msra.mxu0 0.0
  %1309 = vmatpush.msra.mxu0 0.0
  %1310 = vmatpush.msra.mxu0 0.0
  %1311 = vmatpush.msra.mxu0 0.0
  %1312 = vmatpush.msra.mxu0 0.0
  %1313 = vmatpush.msra.mxu0 0.0
  %1314 = vmatpush.msra.mxu0 0.0
  %1315 = vmatpush.msra.mxu0 0.0
  %1316 = vmatpush.msra.mxu0 0.0
  %1317 = vmatpush.msra.mxu0 0.0
  %1318 = vmatpush.msra.mxu0 0.0
  %1319 = vmatpush.msra.mxu0 0.0
  %1320 = vmatpush.msra.mxu0 %v1297
  %1321 = vmatpush.msra.mxu0 %v1295
  %1322 = vmatpush.msra.mxu0 %v1293
  %1323 = vmatpush.msra.mxu0 %v1291
  %1324 = vmatmul.f32.gmra.mxu0 %v1303
  %v1325 = vpop.f32.mrf.mxu0
  %v1326 = vadd.f32 %v1285, %v1325
  %1327 = vmatmul.f32.gmra.mxu0 %v1306
  %v1328 = vpop.f32.mrf.mxu0
  %v1329 = vadd.f32 %v1285, %v1328
  %1330 = vdwg.mxu0
  %v1331 = vadd.f32 %v837, %v1326
  %v1332 = vadd.f32 %v838, %v1329
  %v1333 = vsel %vm94, %v1331, 0.0
  %1334 = vadd.xlane.f32.xlu0 %v1333
  %v1335 = vpop.xlane.xlu0 %1334
  %v1336 = vsel %vm94, %v1332, 0.0
  %1337 = vadd.xlane.f32.xlu0 %v1336
  %v1338 = vpop.xlane.xlu0 %1337
  %v1339 = vmul.f32 %v1335, %v107
  %v1340 = vmul.f32 %v1338, %v107
  %v1341 = vsub.f32 %v1331, %v1339
  %v1342 = vsub.f32 %v1332, %v1340
  %v1343 = vmul.f32 %v1341, %v1341
  %v1344 = vmul.f32 %v1342, %v1342
  %v1345 = vsel %vm94, %v1343, 0.0
  %1346 = vadd.xlane.f32.xlu0 %v1345
  %v1347 = vpop.xlane.xlu0 %1346
  %v1348 = vsel %vm94, %v1344, 0.0
  %1349 = vadd.xlane.f32.xlu0 %v1348
  %v1350 = vpop.xlane.xlu0 %1349
  %v1351 = vmul.f32 %v1347, %v107
  %v1352 = vmul.f32 %v1350, %v107
  %v1353 = vadd.f32 %v1351, 1e-12
  %v1354 = vadd.f32 %v1352, 1e-12
  %v1355 = vrsqrt.pop %v1353
  %v1356 = vmul.f32 %v1355, %v1353
  %v1357 = vmul.f32 %v1356, %v1355
  %v1358 = vmul.f32 0.5, %v1357
  %v1359 = vsub.f32 1.5, %v1358
  %v1360 = vmul.f32 %v1355, %v1359
  %vm1361 = vweird.f32 %v1353
  %vm1362 = vweird.f32 %v1355
  %vm1363 = vmor %vm1361, %vm1362
  %v1364 = vsel %vm1363, %v1355, %v1360
  %v1365 = vrsqrt.pop %v1354
  %v1366 = vmul.f32 %v1365, %v1354
  %v1367 = vmul.f32 %v1366, %v1365
  %v1368 = vmul.f32 0.5, %v1367
  %v1369 = vsub.f32 1.5, %v1368
  %v1370 = vmul.f32 %v1365, %v1369
  %vm1371 = vweird.f32 %v1354
  %vm1372 = vweird.f32 %v1365
  %vm1373 = vmor %vm1371, %vm1372
  %v1374 = vsel %vm1373, %v1365, %v1370
  %v1375 = vmul.f32 %v1341, %v1364
  %v1376 = vmul.f32 %v1342, %v1374
  %1378 = vrot.lane.b32.xlu0 %v1285, 96
  %v1379 = vpop.permute.xlu0 %1378
  %v1381 = vmul.f32 %v1375, %v1379
  %v1382 = vmul.f32 %v1376, %v1379
  %1383 = vrot.lane.b32.xlu0 %v1285, 64
  %v1384 = vpop.permute.xlu0 %1383
  %v1386 = vadd.f32 %v1381, %v1384
  %v1387 = vadd.f32 %v1382, %v1384
  %v1388 = vperm.slane %v858, 2
  %v1390 = vsel %vm94, %v1386, 0
  %v1393 = vsel %vm94, %v1387, 0
  %1395 = vmatpush.msra.mxu0 0.0
  %1396 = vmatpush.msra.mxu0 0.0
  %1397 = vmatpush.msra.mxu0 0.0
  %1398 = vmatpush.msra.mxu0 0.0
  %1399 = vmatpush.msra.mxu0 0.0
  %1400 = vmatpush.msra.mxu0 0.0
  %1401 = vmatpush.msra.mxu0 0.0
  %1402 = vmatpush.msra.mxu0 0.0
  %1403 = vmatpush.msra.mxu0 0.0
  %1404 = vmatpush.msra.mxu0 0.0
  %1405 = vmatpush.msra.mxu0 0.0
  %1406 = vmatpush.msra.mxu0 0.0
  %1407 = vmatpush.msra.mxu0 %v848
  %1408 = vmatpush.msra.mxu0 %v847
  %1409 = vmatpush.msra.mxu0 %v846
  %1410 = vmatpush.msra.mxu0 %v845
  %1411 = vmatmul.f32.gmra.mxu0 %v1390
  %v1412 = vpop.f32.mrf.mxu0
  %v1413 = vadd.f32 %v1388, %v1412
  %1414 = vmatmul.f32.gmra.mxu0 %v1393
  %v1415 = vpop.f32.mrf.mxu0
  %v1416 = vadd.f32 %v1388, %v1415
  %1417 = vdwg.mxu0
  %v1418 = vmul.f32 %v1413, %v1413
  %v1419 = vmul.f32 %v1416, %v1416
  %v1420 = vmul.f32 %v1413, %v1418
  %v1421 = vmul.f32 %v1416, %v1419
  %v1422 = vmul.f32 %v1420, 0.044715
  %v1423 = vmul.f32 %v1421, 0.044715
  %v1424 = vadd.f32 %v1413, %v1422
  %v1425 = vadd.f32 %v1416, %v1423
  %v1426 = vmul.f32 %v1424, 0.7978846
  %v1427 = vmul.f32 %v1425, 0.7978846
  %v1428 = vtanh.pop %v1426
  %v1429 = vtanh.pop %v1427
  %v1430 = vadd.f32 %v1428, 1.0
  %v1431 = vadd.f32 %v1429, 1.0
  %v1432 = vmul.f32 %v1430, 0.5
  %v1433 = vmul.f32 %v1431, 0.5
  %v1434 = vmul.f32 %v1413, %v1432
  %v1435 = vmul.f32 %v1416, %v1433
  %v1436 = vperm.slane %v858, 3
  %v1438 = vsel %vm752, %v1434, 0
  %v1441 = vsel %vm752, %v1435, 0
  %1443 = vmatpush.msra.mxu0 0.0
  %1444 = vmatpush.msra.mxu0 0.0
  %1445 = vmatpush.msra.mxu0 0.0
  %1446 = vmatpush.msra.mxu0 0.0
  %1447 = vmatpush.msra.mxu0 0.0
  %1448 = vmatpush.msra.mxu0 0.0
  %1449 = vmatpush.msra.mxu0 0.0
  %1450 = vmatpush.msra.mxu0 0.0
  %1451 = vmatpush.msra.mxu0 %v856
  %1452 = vmatpush.msra.mxu0 %v855
  %1453 = vmatpush.msra.mxu0 %v854
  %1454 = vmatpush.msra.mxu0 %v853
  %1455 = vmatpush.msra.mxu0 %v852
  %1456 = vmatpush.msra.mxu0 %v851
  %1457 = vmatpush.msra.mxu0 %v850
  %1458 = vmatpush.msra.mxu0 %v849
  %1459 = vmatmul.f32.gmra.mxu0 %v1438
  %v1460 = vpop.f32.mrf.mxu0
  %v1461 = vadd.f32 %v1436, %v1460
  %1462 = vmatmul.f32.gmra.mxu0 %v1441
  %v1463 = vpop.f32.mrf.mxu0
  %v1464 = vadd.f32 %v1436, %v1463
  %1465 = vdwg.mxu0
  %v1466 = vadd.f32 %v1386, %v1461
  %v1467 = vadd.f32 %v1387, %v1464
  %v1468 = vsel %vm94, %v1466, 0.0
  %1469 = vadd.xlane.f32.xlu0 %v1468
  %v1470 = vpop.xlane.xlu0 %1469
  %v1471 = vsel %vm94, %v1467, 0.0
  %1472 = vadd.xlane.f32.xlu0 %v1471
  %v1473 = vpop.xlane.xlu0 %1472
  %v1474 = vmul.f32 %v1470, %v107
  %v1475 = vmul.f32 %v1473, %v107
  %v1476 = vsub.f32 %v1466, %v1474
  %v1477 = vsub.f32 %v1467, %v1475
  %v1478 = vmul.f32 %v1476, %v1476
  %v1479 = vmul.f32 %v1477, %v1477
  %v1480 = vsel %vm94, %v1478, 0.0
  %1481 = vadd.xlane.f32.xlu0 %v1480
  %v1482 = vpop.xlane.xlu0 %1481
  %v1483 = vsel %vm94, %v1479, 0.0
  %1484 = vadd.xlane.f32.xlu0 %v1483
  %v1485 = vpop.xlane.xlu0 %1484
  %v1486 = vmul.f32 %v1482, %v107
  %v1487 = vmul.f32 %v1485, %v107
  %v1488 = vadd.f32 %v1486, 1e-12
  %v1489 = vadd.f32 %v1487, 1e-12
  %v1490 = vrsqrt.pop %v1488
  %v1491 = vmul.f32 %v1490, %v1488
  %v1492 = vmul.f32 %v1491, %v1490
  %v1493 = vmul.f32 0.5, %v1492
  %v1494 = vsub.f32 1.5, %v1493
  %v1495 = vmul.f32 %v1490, %v1494
  %vm1496 = vweird.f32 %v1488
  %vm1497 = vweird.f32 %v1490
  %vm1498 = vmor %vm1496, %vm1497
  %v1499 = vsel %vm1498, %v1490, %v1495
  %v1500 = vrsqrt.pop %v1489
  %v1501 = vmul.f32 %v1500, %v1489
  %v1502 = vmul.f32 %v1501, %v1500
  %v1503 = vmul.f32 0.5, %v1502
  %v1504 = vsub.f32 1.5, %v1503
  %v1505 = vmul.f32 %v1500, %v1504
  %vm1506 = vweird.f32 %v1489
  %vm1507 = vweird.f32 %v1500
  %vm1508 = vmor %vm1506, %vm1507
  %v1509 = vsel %vm1508, %v1500, %v1505
  %v1510 = vmul.f32 %v1476, %v1499
  %v1511 = vmul.f32 %v1477, %v1509
  %1513 = vrot.lane.b32.xlu0 %v1436, 96
  %v1514 = vpop.permute.xlu0 %1513
  %v1516 = vmul.f32 %v1510, %v1514
  %v1517 = vmul.f32 %v1511, %v1514
  %1518 = vrot.lane.b32.xlu0 %v1436, 64
  %v1519 = vpop.permute.xlu0 %1518
  %v1521 = vadd.f32 %v1516, %v1519
  %v1522 = vadd.f32 %v1517, %v1519
  %v1523 = vld [vmem:[%s8] sm:$0xff]
  %v1524 = vld [vmem:[%s8 + $0x8] sm:$0xff]
  %v1525 = vld [vmem:[%s8 + $0x10] sm:$0xff]
  %v1526 = vld [vmem:[%s8 + $0x18] sm:$0xff]
  %v1527 = vld [vmem:[%s9] sm:$0x1]
  %v1529 = vperm.slane %v1527, 0
  %v1532 = vsel %vm94, %v1521, 0
  %v1535 = vsel %vm94, %v1522, 0
  %1537 = vmatpush.msra.mxu0 0.0
  %1538 = vmatpush.msra.mxu0 0.0
  %1539 = vmatpush.msra.mxu0 0.0
  %1540 = vmatpush.msra.mxu0 0.0
  %1541 = vmatpush.msra.mxu0 0.0
  %1542 = vmatpush.msra.mxu0 0.0
  %1543 = vmatpush.msra.mxu0 0.0
  %1544 = vmatpush.msra.mxu0 0.0
  %1545 = vmatpush.msra.mxu0 0.0
  %1546 = vmatpush.msra.mxu0 0.0
  %1547 = vmatpush.msra.mxu0 0.0
  %1548 = vmatpush.msra.mxu0 0.0
  %1549 = vmatpush.msra.mxu0 %v1526
  %1550 = vmatpush.msra.mxu0 %v1525
  %1551 = vmatpush.msra.mxu0 %v1524
  %1552 = vmatpush.msra.mxu0 %v1523
  %1553 = vmatmul.f32.gmra.mxu0 %v1532
  %v1554 = vpop.f32.mrf.mxu0
  %v1555 = vadd.f32 %v1529, %v1554
  %1556 = vmatmul.f32.gmra.mxu0 %v1535
  %v1557 = vpop.f32.mrf.mxu0
  %v1558 = vadd.f32 %v1529, %v1557
  %1559 = vdwg.mxu0
  %v1560 = vtanh.pop %v1555
  %v1561 = vtanh.pop %v1558
  %1566 = vrot.lane.b32.xlu0 %v1523, 96
  %v1567 = vpop.permute.xlu0 %1566
  %1568 = vrot.lane.b32.xlu0 %v1524, 96
  %v1569 = vpop.permute.xlu0 %1568
  %1570 = vrot.lane.b32.xlu0 %v1525, 96
  %v1571 = vpop.permute.xlu0 %1570
  %1572 = vrot.lane.b32.xlu0 %v1526, 96
  %v1573 = vpop.permute.xlu0 %1572
  %1578 = vrot.lane.b32.xlu0 %v1529, 96
  %v1579 = vpop.permute.xlu0 %1578
  %v1582 = vsel %vm94, %v1560, 0
  %v1585 = vsel %vm94, %v1561, 0
  %1587 = vmatpush.msra.mxu0 0.0
  %1588 = vmatpush.msra.mxu0 0.0
  %1589 = vmatpush.msra.mxu0 0.0
  %1590 = vmatpush.msra.mxu0 0.0
  %1591 = vmatpush.msra.mxu0 0.0
  %1592 = vmatpush.msra.mxu0 0.0
  %1593 = vmatpush.msra.mxu0 0.0
  %1594 = vmatpush.msra.mxu0 0.0
  %1595 = vmatpush.msra.mxu0 0.0
  %1596 = vmatpush.msra.mxu0 0.0
  %1597 = vmatpush.msra.mxu0 0.0
  %1598 = vmatpush.msra.mxu0 0.0
  %1599 = vmatpush.msra.mxu0 %v1573
  %1600 = vmatpush.msra.mxu0 %v1571
  %1601 = vmatpush.msra.mxu0 %v1569
  %1602 = vmatpush.msra.mxu0 %v1567
  %1603 = vmatmul.f32.gmra.mxu0 %v1582
  %v1604 = vpop.f32.mrf.mxu0
  %v1605 = vadd.f32 %v1579, %v1604
  %1606 = vmatmul.f32.gmra.mxu0 %v1585
  %v1607 = vpop.f32.mrf.mxu0
  %v1608 = vadd.f32 %v1579, %v1607
  %1609 = vdwg.mxu0
  %vm1610 = vcmask 15360
  %1611 = vst.msk [vmem:[%s10] sm:$0xff] %vm1610, %v1605
  %1612 = vst.msk [vmem:[%s10 + $0x8] sm:$0xff] %vm1610, %v1608
  // Predicated region
  $region42: #{bert_absa_forward.1} parent=0 // pred_check
    _
  $region43: #{bert_absa_forward.1} parent=0 // pred_check_branch
    %1614 = sbr.rel (0) target = $region45
  $region44: #{bert_absa_forward.1} parent=0 // pred_region
    _
  $region45: #{bert_absa_forward.1} parent=0 // pred_fallthru
    _
  // Predicated region
  $region46: #{bert_absa_forward.1} parent=0 // pred_check
    _
  $region47: #{bert_absa_forward.1} parent=0 // pred_check_branch
    %1616 = sbr.rel (0) target = $region49
  $region48: #{bert_absa_forward.1} parent=0 // pred_region
    _
  $region49: #{bert_absa_forward.1} parent=0 // pred_fallthru
    _

</llo_original>
